<compile_context>
chip_gen: v5e
topology: v5e:2x2
jax: 0.10.0
libtpu: 0.0.40
codegen_flags: <defaults>
</compile_context>

<pallas_src>
import functools

import jax
import jax.numpy as jnp
from jax import lax
from jax.experimental import pallas as pl
from jax.experimental.pallas import tpu as pltpu


def _mha_flash_kernel(q_ref, k_ref, v_ref, wq_ref, wk_ref, wv_ref, wo_ref,
                      o_ref, qp_s, m_s, l_s, acc_h, acc_o, *, mxu_dtype):
    """Grid = (q_tile i [parallel], head hi [arbitrary], kv_tile ki [arbitrary]).

    q_ref:  (tq,  dm)   activation tile (mxu_dtype)
    k_ref:  (tkv, dm)   activation tile (mxu_dtype)
    v_ref:  (tkv, dm)   activation tile (mxu_dtype)
    wq_ref: (dm, dk)    this head's W_q, pre-scaled by 1/sqrt(dk) (mxu_dtype)
    wk_ref: (dm, dk)    this head's W_k (mxu_dtype)
    wv_ref: (dm, dv)    this head's W_v (mxu_dtype)
    wo_ref: (dv, dm)    this head's slice of W_o (mxu_dtype)
    o_ref:  (tq, dm)    output tile (written once, on the last (head, kv) step)

    Scratch (persist across the head/kv axes, reset per (q_tile, head)):
      qp_s (tq, dk) mxu_dtype, m_s/l_s (tq, 1) f32, acc_h (tq, dv) f32,
      acc_o (tq, dm) f32 (accumulates the W_o projection over heads).
    """
    hi = pl.program_id(1)
    ki = pl.program_id(2)

    # Per-(q_tile, head) init: project q once, reset flash softmax stats.
    @pl.when(ki == 0)
    def _():
        qp = jnp.dot(q_ref[...], wq_ref[...],
                     preferred_element_type=jnp.float32)        # (tq, dk), scaled
        qp_s[...] = qp.astype(mxu_dtype)
        m_s[...] = jnp.full_like(m_s, -jnp.inf)
        l_s[...] = jnp.zeros_like(l_s)
        acc_h[...] = jnp.zeros_like(acc_h)

    # Project this K/V tile for this head (bf16 MXU operands, f32 accumulate).
    kp = jnp.dot(k_ref[...], wk_ref[...],
                 preferred_element_type=jnp.float32)             # (tkv, dk)
    vp = jnp.dot(v_ref[...], wv_ref[...],
                 preferred_element_type=jnp.float32)             # (tkv, dv)

    # scores = q_proj @ k_proj^T without an XLU transpose: contract last dims.
    s = lax.dot_general(qp_s[...], kp.astype(mxu_dtype),
                        (((1,), (1,)), ((), ())),
                        preferred_element_type=jnp.float32)      # (tq, tkv)

    # Online softmax update — all elementwise math in f32 (v5e: no bf16 VPU/EUP),
    # probs stay in vregs feeding the probs@V matmul (no scratch materialization).
    m_prev = m_s[...]
    m_new = jnp.maximum(m_prev, jnp.max(s, axis=-1, keepdims=True))
    alpha = jnp.exp(m_prev - m_new)
    p = jnp.exp(s - m_new)
    l_s[...] = alpha * l_s[...] + jnp.sum(p, axis=-1, keepdims=True)
    acc_h[...] = alpha * acc_h[...] + jnp.dot(
        p.astype(mxu_dtype), vp.astype(mxu_dtype),
        preferred_element_type=jnp.float32)
    m_s[...] = m_new

    # Per-head finalize: normalize (exact divide) and fold into the W_o output
    # projection accumulated over heads.  Output written exactly once.
    @pl.when(ki == pl.num_programs(2) - 1)
    def _():
        head = acc_h[...] / l_s[...]                             # (tq, dv), exact
        contrib = jnp.dot(head.astype(mxu_dtype), wo_ref[...],
                          preferred_element_type=jnp.float32)    # (tq, dm)

        @pl.when(hi == 0)
        def _():
            acc_o[...] = contrib

        @pl.when(hi > 0)
        def _():
            acc_o[...] = acc_o[...] + contrib

        @pl.when(hi == pl.num_programs(1) - 1)
        def _():
            o_ref[...] = acc_o[...].astype(o_ref.dtype)


def prepare_mha_weights(Wq, Wk, Wv, Wo, *, mxu_dtype=jnp.bfloat16):
    """One-time weight prep (hoisted out of the per-call path).

    Wq/Wk: (h, dm, dk), Wv: (h, dm, dv), Wo: (h*dv, dm).
    Folds 1/sqrt(dk) into Wq, reshapes Wo to (h, dv, dm), casts to MXU dtype.
    """
    h, dm, dk = Wq.shape
    dv = Wv.shape[-1]
    scale = 1.0 / float(dk) ** 0.5
    Wq_p = (Wq * scale).astype(mxu_dtype)
    Wk_p = Wk.astype(mxu_dtype)
    Wv_p = Wv.astype(mxu_dtype)
    Wo_p = Wo.reshape(h, dv, dm).astype(mxu_dtype)
    return Wq_p, Wk_p, Wv_p, Wo_p


def multi_head_attention(q, k, v, Wq_p, Wk_p, Wv_p, Wo_p, *,
                         q_tile=None, kv_tile=None, out_dtype=None):
    """q,k,v: (S, dm). Prepped weights from `prepare_mha_weights`."""
    S, dm = q.shape
    h, _, dk = Wq_p.shape
    dv = Wv_p.shape[-1]
    mxu_dtype = Wq_p.dtype
    out_dtype = out_dtype or q.dtype

    tq = q_tile or min(S, 128)
    tkv = kv_tile or min(S, 128)
    assert S % tq == 0 and S % tkv == 0, "S must be divisible by the tile sizes"
    nq, nkv = S // tq, S // tkv

    # In a real transformer the activations already arrive in bf16; casting
    # here halves the activation HBM->VMEM DMA for this demo.
    qc = q.astype(mxu_dtype)
    kc = k.astype(mxu_dtype)
    vc = v.astype(mxu_dtype)

    kernel = functools.partial(_mha_flash_kernel, mxu_dtype=mxu_dtype)

    itemsize_in = jnp.dtype(mxu_dtype).itemsize
    flops = (2 * S * dm * h * (2 * dk + dv)        # q/k/v projections
             + 2 * h * S * S * (dk + dv)           # scores + probs@V
             + 2 * S * h * dv * dm)                # output projection
    bytes_accessed = ((qc.size + kc.size + vc.size
                       + Wq_p.size + Wk_p.size + Wv_p.size + Wo_p.size)
                      * itemsize_in
                      + S * dm * jnp.dtype(out_dtype).itemsize)
    cost = pl.CostEstimate(flops=flops, transcendentals=h * S * S,
                           bytes_accessed=bytes_accessed)

    return pl.pallas_call(
        kernel,
        out_shape=jax.ShapeDtypeStruct((S, dm), out_dtype),
        grid=(nq, h, nkv),
        in_specs=[
            pl.BlockSpec((tq, dm), lambda i, hi, ki: (i, 0)),            # q
            pl.BlockSpec((tkv, dm), lambda i, hi, ki: (ki, 0)),          # k
            pl.BlockSpec((tkv, dm), lambda i, hi, ki: (ki, 0)),          # v
            pl.BlockSpec((None, dm, dk), lambda i, hi, ki: (hi, 0, 0)),  # Wq (scaled)
            pl.BlockSpec((None, dm, dk), lambda i, hi, ki: (hi, 0, 0)),  # Wk
            pl.BlockSpec((None, dm, dv), lambda i, hi, ki: (hi, 0, 0)),  # Wv
            pl.BlockSpec((None, dv, dm), lambda i, hi, ki: (hi, 0, 0)),  # Wo
        ],
        out_specs=pl.BlockSpec((tq, dm), lambda i, hi, ki: (i, 0)),
        scratch_shapes=[
            pltpu.VMEM((tq, dk), mxu_dtype),     # q_proj for the current head
            pltpu.VMEM((tq, 1), jnp.float32),    # m (running max)
            pltpu.VMEM((tq, 1), jnp.float32),    # l (running denom)
            pltpu.VMEM((tq, dv), jnp.float32),   # per-head attention accumulator
            pltpu.VMEM((tq, dm), jnp.float32),   # output accumulator over heads
        ],
        compiler_params=pltpu.CompilerParams(
            dimension_semantics=("parallel", "arbitrary", "arbitrary"),
            # Safe on all generations; re-derive per-generation (<=~48 MiB on
            # v7x's 64 MiB VMEM, larger tiles on v5e/v6e's 128 MiB) when the
            # tile sizes are tuned for realistic shapes.
            vmem_limit_bytes=32 * 1024 * 1024),
        cost_estimate=cost,
    )(qc, kc, vc, Wq_p, Wk_p, Wv_p, Wo_p)


def multi_head_attention_ref(q, k, v, Wq, Wk, Wv, Wo):
    """Plain-JAX reference mirroring the PyTorch forward (no mask)."""
    h, _, dk = Wq.shape
    heads = []
    for i in range(h):
        qp = q @ Wq[i]
        kp = k @ Wk[i]
        vp = v @ Wv[i]
        s = (qp @ kp.T) / jnp.sqrt(jnp.float32(dk))
        p = jax.nn.softmax(s, axis=-1)
        heads.append(p @ vp)
    return jnp.hstack(heads) @ Wo


if __name__ == "__main__":
    # Small, paper-like shapes (paper: h=8, dm=512, dk=dv=64).  dm=128 keeps
    # the output lane-dense; S=256 with 128-row tiles exercises the q-tile
    # 'parallel' axis, the head accumulation, and the 2-step online softmax.
    h, dm, dk, dv, S = 4, 128, 32, 32, 256

    key = jax.random.PRNGKey(0)
    kq, kk, kvk, kwq, kwk, kwv, kwo = jax.random.split(key, 7)

    q = jax.random.normal(kq, (S, dm), dtype=jnp.float32)
    k = jax.random.normal(kk, (S, dm), dtype=jnp.float32)
    v = jax.random.normal(kvk, (S, dm), dtype=jnp.float32)

    # Deterministic synthetic parameters.  Fan-in scaling (same forward
    # semantics as the module's torch.randn init) keeps the softmax logits
    # O(1) so the bf16-MXU kernel vs f32 reference comparison is meaningful.
    Wq = jax.random.normal(kwq, (h, dm, dk), dtype=jnp.float32) * (dm ** -0.5)
    Wk = jax.random.normal(kwk, (h, dm, dk), dtype=jnp.float32) * (dm ** -0.5)
    Wv = jax.random.normal(kwv, (h, dm, dv), dtype=jnp.float32) * (dm ** -0.5)
    Wo = jax.random.normal(kwo, (h * dv, dm), dtype=jnp.float32) * ((h * dv) ** -0.5)

    # One-time weight prep (scale-fold + bf16 cast), outside the per-call path.
    Wq_p, Wk_p, Wv_p, Wo_p = prepare_mha_weights(Wq, Wk, Wv, Wo)

    out = multi_head_attention(q, k, v, Wq_p, Wk_p, Wv_p, Wo_p)
    out = jax.block_until_ready(out)

    with jax.default_matmul_precision("highest"):
        ref = multi_head_attention_ref(q, k, v, Wq, Wk, Wv, Wo)
    ref = jax.block_until_ready(ref)

    assert out.shape == (S, dm)
    err = float(jnp.max(jnp.abs(out.astype(jnp.float32) - ref)))
    scale = float(jnp.max(jnp.abs(ref)))
    # bf16 MXU operands (softmax math in f32) => bf16-level tolerance vs the
    # full-f32 reference.
    assert err <= 5e-2 * scale + 1e-5, f"mismatch: max_err={err}, max_ref={scale}"

    print("KERNEL_OK")
</pallas_src>

<mosaic_0001>
module attributes {stable_mosaic.version = 11 : i64} {
  func.func @_mha_flash_kernel(%arg0: i32, %arg1: i32, %arg2: i32, %arg3: memref<128x128xbf16, #tpu.memory_space<vmem>>, %arg4: memref<128x128xbf16, #tpu.memory_space<vmem>>, %arg5: memref<128x128xbf16, #tpu.memory_space<vmem>>, %arg6: memref<1x128x32xbf16, #tpu.memory_space<vmem>>, %arg7: memref<1x128x32xbf16, #tpu.memory_space<vmem>>, %arg8: memref<1x128x32xbf16, #tpu.memory_space<vmem>>, %arg9: memref<1x32x128xbf16, #tpu.memory_space<vmem>>, %arg10: memref<128x128xf32, #tpu.memory_space<vmem>>, %arg11: memref<128x32xbf16, #tpu.memory_space<vmem>>, %arg12: memref<128x1xf32, #tpu.memory_space<vmem>>, %arg13: memref<128x1xf32, #tpu.memory_space<vmem>>, %arg14: memref<128x32xf32, #tpu.memory_space<vmem>>, %arg15: memref<128x128xf32, #tpu.memory_space<vmem>>) attributes {dimension_semantics = [#tpu.dimension_semantics<parallel>, #tpu.dimension_semantics<arbitrary>, #tpu.dimension_semantics<arbitrary>], iteration_bounds = array<i64: 2, 4, 2>, scalar_prefetch = 0 : i64, scratch_operands = 5 : i64, tpu.core_type = #tpu.core_type<tc>, window_params = [{transform_indices = @transform_0, window_bounds = array<i64: 128, 128>}, {transform_indices = @transform_1, window_bounds = array<i64: 128, 128>}, {transform_indices = @transform_2, window_bounds = array<i64: 128, 128>}, {transform_indices = @transform_3, window_bounds = array<i64: 1, 128, 32>}, {transform_indices = @transform_4, window_bounds = array<i64: 1, 128, 32>}, {transform_indices = @transform_5, window_bounds = array<i64: 1, 128, 32>}, {transform_indices = @transform_6, window_bounds = array<i64: 1, 32, 128>}, {transform_indices = @transform_7, window_bounds = array<i64: 128, 128>}]} {
    %c0_i32 = arith.constant 0 : i32
    %0 = arith.cmpi eq, %arg2, %c0_i32 : i32
    %1 = arith.extui %0 : i1 to i32
    %c0_i32_0 = arith.constant 0 : i32
    %2 = arith.cmpi ne, %1, %c0_i32_0 : i32
    scf.if %2 {
      %c0_30 = arith.constant 0 : index
      %c0_31 = arith.constant 0 : index
      %41 = vector.load %arg3[%c0_30, %c0_31] : memref<128x128xbf16, #tpu.memory_space<vmem>>, vector<128x128xbf16>
      %c0_32 = arith.constant 0 : index
      %c0_33 = arith.constant 0 : index
      %c0_34 = arith.constant 0 : index
      %42 = vector.load %arg6[%c0_32, %c0_33, %c0_34] : memref<1x128x32xbf16, #tpu.memory_space<vmem>>, vector<1x128x32xbf16>
      %43 = vector.shape_cast %42 : vector<1x128x32xbf16> to vector<128x32xbf16>
      %cst_35 = arith.constant dense<0.000000e+00> : vector<128x32xf32>
      %44 = tpu.matmul %41, %43, %cst_35 {dimension_numbers = #tpu.dot_dimension_numbers<[1], [0], [0], [1], [0, 0, 1, 1], [], []>} : vector<128x128xbf16>, vector<128x32xbf16>, vector<128x32xf32> -> vector<128x32xf32>
      %45 = arith.truncf %44 : vector<128x32xf32> to vector<128x32xbf16>
      %c0_36 = arith.constant 0 : index
      %c0_37 = arith.constant 0 : index
      %46 = vector.load %arg11[%c0_36, %c0_37] : memref<128x32xbf16, #tpu.memory_space<vmem>>, vector<128x32xbf16>
      tpu.vector_store %arg11[%c0_36, %c0_37], %45 {strides = array<i32>} : memref<128x32xbf16, #tpu.memory_space<vmem>>, vector<128x32xbf16>,
      %cst_38 = arith.constant 0xFF800000 : f32
      %47 = vector.broadcast %cst_38 : f32 to vector<128x1xf32>
      %c0_39 = arith.constant 0 : index
      %c0_40 = arith.constant 0 : index
      %48 = vector.load %arg12[%c0_39, %c0_40] : memref<128x1xf32, #tpu.memory_space<vmem>>, vector<128x1xf32>
      tpu.vector_store %arg12[%c0_39, %c0_40], %47 {strides = array<i32>} : memref<128x1xf32, #tpu.memory_space<vmem>>, vector<128x1xf32>,
      %cst_41 = arith.constant 0.000000e+00 : f32
      %49 = vector.broadcast %cst_41 : f32 to vector<128x1xf32>
      %c0_42 = arith.constant 0 : index
      %c0_43 = arith.constant 0 : index
      %50 = vector.load %arg13[%c0_42, %c0_43] : memref<128x1xf32, #tpu.memory_space<vmem>>, vector<128x1xf32>
      tpu.vector_store %arg13[%c0_42, %c0_43], %49 {strides = array<i32>} : memref<128x1xf32, #tpu.memory_space<vmem>>, vector<128x1xf32>,
      %cst_44 = arith.constant 0.000000e+00 : f32
      %51 = vector.broadcast %cst_44 : f32 to vector<128x32xf32>
      %c0_45 = arith.constant 0 : index
      %c0_46 = arith.constant 0 : index
      %52 = vector.load %arg14[%c0_45, %c0_46] : memref<128x32xf32, #tpu.memory_space<vmem>>, vector<128x32xf32>
      tpu.vector_store %arg14[%c0_45, %c0_46], %51 {strides = array<i32>} : memref<128x32xf32, #tpu.memory_space<vmem>>, vector<128x32xf32>,
    } else {
    }
    %c0 = arith.constant 0 : index
    %c0_1 = arith.constant 0 : index
    %3 = vector.load %arg4[%c0, %c0_1] : memref<128x128xbf16, #tpu.memory_space<vmem>>, vector<128x128xbf16>
    %c0_2 = arith.constant 0 : index
    %c0_3 = arith.constant 0 : index
    %c0_4 = arith.constant 0 : index
    %4 = vector.load %arg7[%c0_2, %c0_3, %c0_4] : memref<1x128x32xbf16, #tpu.memory_space<vmem>>, vector<1x128x32xbf16>
    %5 = vector.shape_cast %4 : vector<1x128x32xbf16> to vector<128x32xbf16>
    %cst = arith.constant dense<0.000000e+00> : vector<128x32xf32>
    %6 = tpu.matmul %3, %5, %cst {dimension_numbers = #tpu.dot_dimension_numbers<[1], [0], [0], [1], [0, 0, 1, 1], [], []>} : vector<128x128xbf16>, vector<128x32xbf16>, vector<128x32xf32> -> vector<128x32xf32>
    %c0_5 = arith.constant 0 : index
    %c0_6 = arith.constant 0 : index
    %7 = vector.load %arg5[%c0_5, %c0_6] : memref<128x128xbf16, #tpu.memory_space<vmem>>, vector<128x128xbf16>
    %c0_7 = arith.constant 0 : index
    %c0_8 = arith.constant 0 : index
    %c0_9 = arith.constant 0 : index
    %8 = vector.load %arg8[%c0_7, %c0_8, %c0_9] : memref<1x128x32xbf16, #tpu.memory_space<vmem>>, vector<1x128x32xbf16>
    %9 = vector.shape_cast %8 : vector<1x128x32xbf16> to vector<128x32xbf16>
    %cst_10 = arith.constant dense<0.000000e+00> : vector<128x32xf32>
    %10 = tpu.matmul %7, %9, %cst_10 {dimension_numbers = #tpu.dot_dimension_numbers<[1], [0], [0], [1], [0, 0, 1, 1], [], []>} : vector<128x128xbf16>, vector<128x32xbf16>, vector<128x32xf32> -> vector<128x32xf32>
    %c0_11 = arith.constant 0 : index
    %c0_12 = arith.constant 0 : index
    %11 = vector.load %arg11[%c0_11, %c0_12] : memref<128x32xbf16, #tpu.memory_space<vmem>>, vector<128x32xbf16>
    %12 = arith.truncf %6 : vector<128x32xf32> to vector<128x32xbf16>
    %cst_13 = arith.constant dense<0.000000e+00> : vector<128x128xf32>
    %13 = tpu.matmul %11, %12, %cst_13 {dimension_numbers = #tpu.dot_dimension_numbers<[1], [1], [0], [0], [0, 0, 1, 0], [], []>} : vector<128x32xbf16>, vector<128x32xbf16>, vector<128x128xf32> -> vector<128x128xf32>
    %c0_14 = arith.constant 0 : index
    %c0_15 = arith.constant 0 : index
    %14 = vector.load %arg12[%c0_14, %c0_15] : memref<128x1xf32, #tpu.memory_space<vmem>>, vector<128x1xf32>
    %cst_16 = arith.constant dense<0xFF800000> : vector<128xf32>
    %15 = vector.multi_reduction <maximumf>, %13, %cst_16 [1] : vector<128x128xf32> to vector<128xf32>
    %16 = vector.shape_cast %15 : vector<128xf32> to vector<128x1xf32>
    %17 = arith.maximumf %14, %16 : vector<128x1xf32>
    %18 = arith.subf %14, %17 : vector<128x1xf32>
    %19 = math.exp %18 : vector<128x1xf32>
    %20 = vector.broadcast %17 : vector<128x1xf32> to vector<128x128xf32>
    %21 = arith.subf %13, %20 : vector<128x128xf32>
    %22 = math.exp %21 : vector<128x128xf32>
    %c0_17 = arith.constant 0 : index
    %c0_18 = arith.constant 0 : index
    %23 = vector.load %arg13[%c0_17, %c0_18] : memref<128x1xf32, #tpu.memory_space<vmem>>, vector<128x1xf32>
    %24 = arith.mulf %19, %23 : vector<128x1xf32>
    %cst_19 = arith.constant dense<0.000000e+00> : vector<128xf32>
    %25 = vector.multi_reduction <add>, %22, %cst_19 [1] : vector<128x128xf32> to vector<128xf32>
    %26 = vector.shape_cast %25 : vector<128xf32> to vector<128x1xf32>
    %27 = arith.addf %24, %26 : vector<128x1xf32>
    %c0_20 = arith.constant 0 : index
    %c0_21 = arith.constant 0 : index
    %28 = vector.load %arg13[%c0_20, %c0_21] : memref<128x1xf32, #tpu.memory_space<vmem>>, vector<128x1xf32>
    tpu.vector_store %arg13[%c0_20, %c0_21], %27 {strides = array<i32>} : memref<128x1xf32, #tpu.memory_space<vmem>>, vector<128x1xf32>,
    %c0_22 = arith.constant 0 : index
    %c0_23 = arith.constant 0 : index
    %29 = vector.load %arg14[%c0_22, %c0_23] : memref<128x32xf32, #tpu.memory_space<vmem>>, vector<128x32xf32>
    %30 = vector.broadcast %19 : vector<128x1xf32> to vector<128x32xf32>
    %31 = arith.mulf %30, %29 : vector<128x32xf32>
    %32 = arith.truncf %22 : vector<128x128xf32> to vector<128x128xbf16>
    %33 = arith.truncf %10 : vector<128x32xf32> to vector<128x32xbf16>
    %cst_24 = arith.constant dense<0.000000e+00> : vector<128x32xf32>
    %34 = tpu.matmul %32, %33, %cst_24 {dimension_numbers = #tpu.dot_dimension_numbers<[1], [0], [0], [1], [0, 0, 1, 1], [], []>} : vector<128x128xbf16>, vector<128x32xbf16>, vector<128x32xf32> -> vector<128x32xf32>
    %35 = arith.addf %31, %34 : vector<128x32xf32>
    %c0_25 = arith.constant 0 : index
    %c0_26 = arith.constant 0 : index
    %36 = vector.load %arg14[%c0_25, %c0_26] : memref<128x32xf32, #tpu.memory_space<vmem>>, vector<128x32xf32>
    tpu.vector_store %arg14[%c0_25, %c0_26], %35 {strides = array<i32>} : memref<128x32xf32, #tpu.memory_space<vmem>>, vector<128x32xf32>,
    %c0_27 = arith.constant 0 : index
    %c0_28 = arith.constant 0 : index
    %37 = vector.load %arg12[%c0_27, %c0_28] : memref<128x1xf32, #tpu.memory_space<vmem>>, vector<128x1xf32>
    tpu.vector_store %arg12[%c0_27, %c0_28], %17 {strides = array<i32>} : memref<128x1xf32, #tpu.memory_space<vmem>>, vector<128x1xf32>,
    %c1_i32 = arith.constant 1 : i32
    %38 = arith.cmpi eq, %arg2, %c1_i32 : i32
    %39 = arith.extui %38 : i1 to i32
    %c0_i32_29 = arith.constant 0 : i32
    %40 = arith.cmpi ne, %39, %c0_i32_29 : i32
    scf.if %40 {
      %c0_30 = arith.constant 0 : index
      %c0_31 = arith.constant 0 : index
      %41 = vector.load %arg14[%c0_30, %c0_31] : memref<128x32xf32, #tpu.memory_space<vmem>>, vector<128x32xf32>
      %c0_32 = arith.constant 0 : index
      %c0_33 = arith.constant 0 : index
      %42 = vector.load %arg13[%c0_32, %c0_33] : memref<128x1xf32, #tpu.memory_space<vmem>>, vector<128x1xf32>
      %43 = vector.broadcast %42 : vector<128x1xf32> to vector<128x32xf32>
      %44 = arith.divf %41, %43 : vector<128x32xf32>
      %45 = arith.truncf %44 : vector<128x32xf32> to vector<128x32xbf16>
      %c0_34 = arith.constant 0 : index
      %c0_35 = arith.constant 0 : index
      %c0_36 = arith.constant 0 : index
      %46 = vector.load %arg9[%c0_34, %c0_35, %c0_36] : memref<1x32x128xbf16, #tpu.memory_space<vmem>>, vector<1x32x128xbf16>
      %47 = vector.shape_cast %46 : vector<1x32x128xbf16> to vector<32x128xbf16>
      %cst_37 = arith.constant dense<0.000000e+00> : vector<128x128xf32>
      %48 = tpu.matmul %45, %47, %cst_37 {dimension_numbers = #tpu.dot_dimension_numbers<[1], [0], [0], [1], [0, 0, 1, 1], [], []>} : vector<128x32xbf16>, vector<32x128xbf16>, vector<128x128xf32> -> vector<128x128xf32>
      %c0_i32_38 = arith.constant 0 : i32
      %49 = arith.cmpi eq, %arg1, %c0_i32_38 : i32
      %50 = arith.extui %49 : i1 to i32
      %c0_i32_39 = arith.constant 0 : i32
      %51 = arith.cmpi ne, %50, %c0_i32_39 : i32
      scf.if %51 {
        %c0_43 = arith.constant 0 : index
        %c0_44 = arith.constant 0 : index
        %58 = vector.load %arg15[%c0_43, %c0_44] : memref<128x128xf32, #tpu.memory_space<vmem>>, vector<128x128xf32>
        tpu.vector_store %arg15[%c0_43, %c0_44], %48 {strides = array<i32>} : memref<128x128xf32, #tpu.memory_space<vmem>>, vector<128x128xf32>,
      } else {
      }
      %c0_i32_40 = arith.constant 0 : i32
      %52 = arith.cmpi sgt, %arg1, %c0_i32_40 : i32
      %53 = arith.extui %52 : i1 to i32
      %c0_i32_41 = arith.constant 0 : i32
      %54 = arith.cmpi ne, %53, %c0_i32_41 : i32
      scf.if %54 {
        %c0_43 = arith.constant 0 : index
        %c0_44 = arith.constant 0 : index
        %58 = vector.load %arg15[%c0_43, %c0_44] : memref<128x128xf32, #tpu.memory_space<vmem>>, vector<128x128xf32>
        %59 = arith.addf %58, %48 : vector<128x128xf32>
        %c0_45 = arith.constant 0 : index
        %c0_46 = arith.constant 0 : index
        %60 = vector.load %arg15[%c0_45, %c0_46] : memref<128x128xf32, #tpu.memory_space<vmem>>, vector<128x128xf32>
        tpu.vector_store %arg15[%c0_45, %c0_46], %59 {strides = array<i32>} : memref<128x128xf32, #tpu.memory_space<vmem>>, vector<128x128xf32>,
      } else {
      }
      %c3_i32 = arith.constant 3 : i32
      %55 = arith.cmpi eq, %arg1, %c3_i32 : i32
      %56 = arith.extui %55 : i1 to i32
      %c0_i32_42 = arith.constant 0 : i32
      %57 = arith.cmpi ne, %56, %c0_i32_42 : i32
      scf.if %57 {
        %c0_43 = arith.constant 0 : index
        %c0_44 = arith.constant 0 : index
        %58 = vector.load %arg15[%c0_43, %c0_44] : memref<128x128xf32, #tpu.memory_space<vmem>>, vector<128x128xf32>
        %c0_45 = arith.constant 0 : index
        %c0_46 = arith.constant 0 : index
        %59 = vector.load %arg10[%c0_45, %c0_46] : memref<128x128xf32, #tpu.memory_space<vmem>>, vector<128x128xf32>
        tpu.vector_store %arg10[%c0_45, %c0_46], %58 {strides = array<i32>} : memref<128x128xf32, #tpu.memory_space<vmem>>, vector<128x128xf32>,
      } else {
      }
    } else {
    }
    return
  }
  func.func @transform_0(%arg0: i32, %arg1: i32, %arg2: i32) -> (i32, i32) {
    %c0_i32 = arith.constant 0 : i32
    %c0_i32_0 = arith.constant 0 : i32
    return %arg0, %c0_i32 : i32, i32
  }
  func.func @transform_1(%arg0: i32, %arg1: i32, %arg2: i32) -> (i32, i32) {
    %c0_i32 = arith.constant 0 : i32
    %c0_i32_0 = arith.constant 0 : i32
    return %arg2, %c0_i32 : i32, i32
  }
  func.func @transform_2(%arg0: i32, %arg1: i32, %arg2: i32) -> (i32, i32) {
    %c0_i32 = arith.constant 0 : i32
    %c0_i32_0 = arith.constant 0 : i32
    return %arg2, %c0_i32 : i32, i32
  }
  func.func @transform_3(%arg0: i32, %arg1: i32, %arg2: i32) -> (i32, i32, i32) {
    %c0_i32 = arith.constant 0 : i32
    %c0_i32_0 = arith.constant 0 : i32
    %c0_i32_1 = arith.constant 0 : i32
    return %arg1, %c0_i32, %c0_i32_0 : i32, i32, i32
  }
  func.func @transform_4(%arg0: i32, %arg1: i32, %arg2: i32) -> (i32, i32, i32) {
    %c0_i32 = arith.constant 0 : i32
    %c0_i32_0 = arith.constant 0 : i32
    %c0_i32_1 = arith.constant 0 : i32
    return %arg1, %c0_i32, %c0_i32_0 : i32, i32, i32
  }
  func.func @transform_5(%arg0: i32, %arg1: i32, %arg2: i32) -> (i32, i32, i32) {
    %c0_i32 = arith.constant 0 : i32
    %c0_i32_0 = arith.constant 0 : i32
    %c0_i32_1 = arith.constant 0 : i32
    return %arg1, %c0_i32, %c0_i32_0 : i32, i32, i32
  }
  func.func @transform_6(%arg0: i32, %arg1: i32, %arg2: i32) -> (i32, i32, i32) {
    %c0_i32 = arith.constant 0 : i32
    %c0_i32_0 = arith.constant 0 : i32
    %c0_i32_1 = arith.constant 0 : i32
    return %arg1, %c0_i32, %c0_i32_0 : i32, i32, i32
  }
  func.func @transform_7(%arg0: i32, %arg1: i32, %arg2: i32) -> (i32, i32) {
    %c0_i32 = arith.constant 0 : i32
    %c0_i32_0 = arith.constant 0 : i32
    return %arg0, %c0_i32 : i32, i32
  }
}

</mosaic_0001>

<llo_original>
// kernel: tpu_custom_call.1
$region0: #{tpu_custom_call.1}
  #allocation0 [shape = 'u32[]', space=smem, size = 0x4, offset = 0x4, fixed_abs, tag = 'smem constant byte address 0x4 - core index']
  #allocation1 [shape = 'u32[72,128]{1,0:T(1,128)}', space=vmem, size = 0x9000, scoped, tag = 'internal scratch']
  #allocation2 [shape = 'bf16[128,32]{1,0:T(8,128)(2,1)}', space=vmem, size = 0x8000, scoped, tag = 'scratch operand']
  #allocation3 [shape = 'f32[128,1]{1,0:T(8,128)}', space=vmem, size = 0x10000, scoped, tag = 'scratch operand']
  #allocation4 [shape = 'f32[128,1]{1,0:T(8,128)}', space=vmem, size = 0x10000, scoped, tag = 'scratch operand']
  #allocation5 [shape = 'f32[128,32]{1,0:T(8,128)}', space=vmem, size = 0x10000, scoped, tag = 'scratch operand']
  #allocation6 [shape = 'f32[128,128]{1,0:T(8,128)}', space=vmem, size = 0x10000, scoped, tag = 'scratch operand']
  %s0 = inlined_call_operand.vmem [shape: bf16[256,128], index: 0, kind: input, shape index: {}]
  %s1 = inlined_call_operand.vmem [shape: bf16[256,128], index: 1, kind: input, shape index: {}]
  %s2 = inlined_call_operand.vmem [shape: bf16[256,128], index: 2, kind: input, shape index: {}]
  %s3 = inlined_call_operand.vmem [shape: bf16[4,128,32], index: 3, kind: input, shape index: {}]
  %s4 = inlined_call_operand.vmem [shape: bf16[4,128,32], index: 4, kind: input, shape index: {}]
  %s5 = inlined_call_operand.vmem [shape: bf16[4,128,32], index: 5, kind: input, shape index: {}]
  %s6 = inlined_call_operand.vmem [shape: bf16[4,32,128], index: 6, kind: input, shape index: {}]
  %s7 = inlined_call_operand.hbm [shape: f32[256,128], index: 7, kind: output, shape index: {}]
  %s8 = sld [smem:[#allocation0]]
  $region81: #{tpu_custom_call.1} parent=0
    _
  %s10 = ssub.s32 1, %s8
  %s11 = scalar_select 0, %s10, %s8
  $region1: #{tpu_custom_call.1} parent=0
    #allocation7 [shape = 'u8[131072]{0}', space=vmem, size = 0x20000, scoped, tag = 'output window, operand 0']
    #allocation8 [shape = 's32[2]{0}', space=sflag, size = 0x8, scoped, tag = 'scoped memory for tpu_custom_call.1']
    %12 = vsyncpa [#allocation8], 0
    %s13 = scalar_lea.sflag [#allocation8], 1
    %14 = vsyncpa %s13, 0
    loop: start=0, step=1, limit=18
    $region2: #{tpu_custom_call.1} parent=1 // loop_pre_header
      _
    $region3: #{tpu_custom_call.1} parent=1 // loop_header
      %s16 = sphi 0, %s20
      %p17 = scmp.ge.s32.totalorder %s16, 18
      %s23 = sphi 0, %s42
      %s24 = sphi 0, %s38
      %s25 = sphi 0, %s34
      %s26 = sphi 0, %s23
      %s27 = sphi 0, %s24
      %s28 = sphi 0, %s25
      %s29 = sphi 0, %s26
      %s30 = sphi 0, %s27
      %s31 = sphi 0, %s28
      %s45 = sphi 0, %s47
      %s48 = sphi 0, %s45
      %s49 = sphi 0, %s48
      %s65 = sphi 0, %s49
      %s71 = sphi 0, %s73
      %s74 = sphi 0, %s71
      %s75 = sphi 0, %s74
      %s91 = sphi 0, %s75
      %s97 = sphi 0, %s99
      %s100 = sphi 0, %s97
      %s101 = sphi 0, %s100
      %s117 = sphi 0, %s101
      %s123 = sphi 0, %s125
      %s126 = sphi 0, %s123
      %s127 = sphi 0, %s126
      %s143 = sphi 0, %s127
      %s149 = sphi 0, %s151
      %s152 = sphi 0, %s149
      %s153 = sphi 0, %s152
      %s169 = sphi 0, %s153
      %s175 = sphi 0, %s177
      %s178 = sphi 0, %s175
      %s179 = sphi 0, %s178
      %s195 = sphi 0, %s179
      %s201 = sphi 0, %s203
      %s204 = sphi 0, %s201
      %s205 = sphi 0, %s204
      %s221 = sphi 0, %s205
      %s227 = sphi 0, %s229
      %s230 = sphi 0, %s227
      %s231 = sphi 0, %s230
      %s247 = sphi 0, %s231
    $region4: #{tpu_custom_call.1} parent=1 // loop_header_branch
      %19 = sbr.rel (%p17) target = $region8
    $region5: #{tpu_custom_call.1} parent=1 // loop_body
      %s21 = ssub.s32 %s16, 1
      %s22 = ssub.s32 %s16, 2
      %s32 = sadd.s32 1, %s25
      %p33 = scmp.ge.s32.totalorder %s32, 2
      %s34 = scalar_select %p33, 0, %s32
      %s35 = sadd.s32 1, %s24
      %s36 = scalar_select %p33, %s35, %s24
      %p37 = scmp.ge.s32.totalorder %s36, 4
      %s38 = scalar_select %p37, 0, %s36
      %s39 = sadd.s32 1, %s23
      %s40 = scalar_select %p37, %s39, %s23
      %p41 = scmp.ge.s32.totalorder %s40, 2
      %s42 = scalar_select %p41, 0, %s40
      %s43 = ssub.s32 %s23, %s42
      %p44 = scmp.eq.s32.totalorder %s43, 0
      %s46 = sadd.s32 %s45, 1
      %s47 = scalar_select %p44, %s45, %s46
      %p50 = pneg %p44
      %p51 = scmp.eq.s32.totalorder %s16, 15
      %p52 = por %p50, %p51
      %p53 = scmp.ne.s32.totalorder %s45, %s48
      %p54 = scmp.eq.s32.totalorder %s16, 0
      %p55 = por %p53, %p54
      %p56 = scmp.ne.s32.totalorder %s45, %s48
      %p57 = scmp.eq.s32.totalorder %s21, 15
      %p58 = por %p56, %p57
      %p59 = scmp.ne.s32.totalorder %s48, %s49
      %p60 = scmp.eq.s32.totalorder %s21, 0
      %p61 = por %p59, %p60
      %p62 = scmp.ne.s32.totalorder %s48, %s49
      %p63 = scmp.eq.s32.totalorder %s22, 15
      %p64 = por %p62, %p63
      %p66 = scmp.ne.s32.totalorder %s49, %s65
      %p67 = scmp.eq.s32.totalorder %s22, 0
      %p68 = por %p66, %p67
      %s69 = ssub.s32 %s25, %s34
      %p70 = scmp.eq.s32.totalorder %s69, 0
      %s72 = sadd.s32 %s71, 1
      %s73 = scalar_select %p70, %s71, %s72
      %p76 = pneg %p70
      %p77 = scmp.eq.s32.totalorder %s16, 15
      %p78 = por %p76, %p77
      %p79 = scmp.ne.s32.totalorder %s71, %s74
      %p80 = scmp.eq.s32.totalorder %s16, 0
      %p81 = por %p79, %p80
      %p82 = scmp.ne.s32.totalorder %s71, %s74
      %p83 = scmp.eq.s32.totalorder %s21, 15
      %p84 = por %p82, %p83
      %p85 = scmp.ne.s32.totalorder %s74, %s75
      %p86 = scmp.eq.s32.totalorder %s21, 0
      %p87 = por %p85, %p86
      %p88 = scmp.ne.s32.totalorder %s74, %s75
      %p89 = scmp.eq.s32.totalorder %s22, 15
      %p90 = por %p88, %p89
      %p92 = scmp.ne.s32.totalorder %s75, %s91
      %p93 = scmp.eq.s32.totalorder %s22, 0
      %p94 = por %p92, %p93
      %s95 = ssub.s32 %s25, %s34
      %p96 = scmp.eq.s32.totalorder %s95, 0
      %s98 = sadd.s32 %s97, 1
      %s99 = scalar_select %p96, %s97, %s98
      %p102 = pneg %p96
      %p103 = scmp.eq.s32.totalorder %s16, 15
      %p104 = por %p102, %p103
      %p105 = scmp.ne.s32.totalorder %s97, %s100
      %p106 = scmp.eq.s32.totalorder %s16, 0
      %p107 = por %p105, %p106
      %p108 = scmp.ne.s32.totalorder %s97, %s100
      %p109 = scmp.eq.s32.totalorder %s21, 15
      %p110 = por %p108, %p109
      %p111 = scmp.ne.s32.totalorder %s100, %s101
      %p112 = scmp.eq.s32.totalorder %s21, 0
      %p113 = por %p111, %p112
      %p114 = scmp.ne.s32.totalorder %s100, %s101
      %p115 = scmp.eq.s32.totalorder %s22, 15
      %p116 = por %p114, %p115
      %p118 = scmp.ne.s32.totalorder %s101, %s117
      %p119 = scmp.eq.s32.totalorder %s22, 0
      %p120 = por %p118, %p119
      %s121 = ssub.s32 %s24, %s38
      %p122 = scmp.eq.s32.totalorder %s121, 0
      %s124 = sadd.s32 %s123, 1
      %s125 = scalar_select %p122, %s123, %s124
      %p128 = pneg %p122
      %p129 = scmp.eq.s32.totalorder %s16, 15
      %p130 = por %p128, %p129
      %p131 = scmp.ne.s32.totalorder %s123, %s126
      %p132 = scmp.eq.s32.totalorder %s16, 0
      %p133 = por %p131, %p132
      %p134 = scmp.ne.s32.totalorder %s123, %s126
      %p135 = scmp.eq.s32.totalorder %s21, 15
      %p136 = por %p134, %p135
      %p137 = scmp.ne.s32.totalorder %s126, %s127
      %p138 = scmp.eq.s32.totalorder %s21, 0
      %p139 = por %p137, %p138
      %p140 = scmp.ne.s32.totalorder %s126, %s127
      %p141 = scmp.eq.s32.totalorder %s22, 15
      %p142 = por %p140, %p141
      %p144 = scmp.ne.s32.totalorder %s127, %s143
      %p145 = scmp.eq.s32.totalorder %s22, 0
      %p146 = por %p144, %p145
      %s147 = ssub.s32 %s24, %s38
      %p148 = scmp.eq.s32.totalorder %s147, 0
      %s150 = sadd.s32 %s149, 1
      %s151 = scalar_select %p148, %s149, %s150
      %p154 = pneg %p148
      %p155 = scmp.eq.s32.totalorder %s16, 15
      %p156 = por %p154, %p155
      %p157 = scmp.ne.s32.totalorder %s149, %s152
      %p158 = scmp.eq.s32.totalorder %s16, 0
      %p159 = por %p157, %p158
      %p160 = scmp.ne.s32.totalorder %s149, %s152
      %p161 = scmp.eq.s32.totalorder %s21, 15
      %p162 = por %p160, %p161
      %p163 = scmp.ne.s32.totalorder %s152, %s153
      %p164 = scmp.eq.s32.totalorder %s21, 0
      %p165 = por %p163, %p164
      %p166 = scmp.ne.s32.totalorder %s152, %s153
      %p167 = scmp.eq.s32.totalorder %s22, 15
      %p168 = por %p166, %p167
      %p170 = scmp.ne.s32.totalorder %s153, %s169
      %p171 = scmp.eq.s32.totalorder %s22, 0
      %p172 = por %p170, %p171
      %s173 = ssub.s32 %s24, %s38
      %p174 = scmp.eq.s32.totalorder %s173, 0
      %s176 = sadd.s32 %s175, 1
      %s177 = scalar_select %p174, %s175, %s176
      %p180 = pneg %p174
      %p181 = scmp.eq.s32.totalorder %s16, 15
      %p182 = por %p180, %p181
      %p183 = scmp.ne.s32.totalorder %s175, %s178
      %p184 = scmp.eq.s32.totalorder %s16, 0
      %p185 = por %p183, %p184
      %p186 = scmp.ne.s32.totalorder %s175, %s178
      %p187 = scmp.eq.s32.totalorder %s21, 15
      %p188 = por %p186, %p187
      %p189 = scmp.ne.s32.totalorder %s178, %s179
      %p190 = scmp.eq.s32.totalorder %s21, 0
      %p191 = por %p189, %p190
      %p192 = scmp.ne.s32.totalorder %s178, %s179
      %p193 = scmp.eq.s32.totalorder %s22, 15
      %p194 = por %p192, %p193
      %p196 = scmp.ne.s32.totalorder %s179, %s195
      %p197 = scmp.eq.s32.totalorder %s22, 0
      %p198 = por %p196, %p197
      %s199 = ssub.s32 %s24, %s38
      %p200 = scmp.eq.s32.totalorder %s199, 0
      %s202 = sadd.s32 %s201, 1
      %s203 = scalar_select %p200, %s201, %s202
      %p206 = pneg %p200
      %p207 = scmp.eq.s32.totalorder %s16, 15
      %p208 = por %p206, %p207
      %p209 = scmp.ne.s32.totalorder %s201, %s204
      %p210 = scmp.eq.s32.totalorder %s16, 0
      %p211 = por %p209, %p210
      %p212 = scmp.ne.s32.totalorder %s201, %s204
      %p213 = scmp.eq.s32.totalorder %s21, 15
      %p214 = por %p212, %p213
      %p215 = scmp.ne.s32.totalorder %s204, %s205
      %p216 = scmp.eq.s32.totalorder %s21, 0
      %p217 = por %p215, %p216
      %p218 = scmp.ne.s32.totalorder %s204, %s205
      %p219 = scmp.eq.s32.totalorder %s22, 15
      %p220 = por %p218, %p219
      %p222 = scmp.ne.s32.totalorder %s205, %s221
      %p223 = scmp.eq.s32.totalorder %s22, 0
      %p224 = por %p222, %p223
      %s225 = ssub.s32 %s23, %s42
      %p226 = scmp.eq.s32.totalorder %s225, 0
      %s228 = sadd.s32 %s227, 1
      %s229 = scalar_select %p226, %s227, %s228
      %p232 = pneg %p226
      %p233 = scmp.eq.s32.totalorder %s16, 15
      %p234 = por %p232, %p233
      %p235 = scmp.ne.s32.totalorder %s227, %s230
      %p236 = scmp.eq.s32.totalorder %s16, 0
      %p237 = por %p235, %p236
      %p238 = scmp.ne.s32.totalorder %s227, %s230
      %p239 = scmp.eq.s32.totalorder %s21, 15
      %p240 = por %p238, %p239
      %p241 = scmp.ne.s32.totalorder %s230, %s231
      %p242 = scmp.eq.s32.totalorder %s21, 0
      %p243 = por %p241, %p242
      %p244 = scmp.ne.s32.totalorder %s230, %s231
      %p245 = scmp.eq.s32.totalorder %s22, 15
      %p246 = por %p244, %p245
      %p248 = scmp.ne.s32.totalorder %s231, %s247
      %p249 = scmp.eq.s32.totalorder %s22, 0
      %p250 = por %p248, %p249
      %p251 = scmp.le.s32.totalorder 1, %s16
      %p252 = scmp.lt.s32.totalorder %s16, 17
      %p253 = pnand %p251, %p252
      %p254 = pneg %p253
      // Predicated region
      $region9: #{tpu_custom_call.1} parent=5 // pred_check
        _
      $region10: #{tpu_custom_call.1} parent=5 // pred_check_branch
        %256 = sbr.rel (%p253) target = $region12
      $region11: #{tpu_custom_call.1} parent=5 // pred_region
        %s257 = ssub.s32 %s16, 1
      $region12: #{tpu_custom_call.1} parent=5 // pred_fallthru
        _
      %p258 = scmp.lt.s32.totalorder %s16, 16
      // Predicated region
      $region13: #{tpu_custom_call.1} parent=5 // pred_check
        %p259 = pneg %p258
      $region14: #{tpu_custom_call.1} parent=5 // pred_check_branch
        %261 = sbr.rel (%p259) target = $region16
      $region15: #{tpu_custom_call.1} parent=5 // pred_region
        // Predicated region
        $region17: #{tpu_custom_call.1} parent=15 // pred_check
          %p262 = pneg %p55
        $region18: #{tpu_custom_call.1} parent=15 // pred_check_branch
          %264 = sbr.rel (%p262) target = $region20
        $region19: #{tpu_custom_call.1} parent=15 // pred_region
          %s265 = smul.u32 16, %s23
          %p266 = scmp.lt.s32.totalorder %s265, 31
          %s267 = scalar_select %p266, %s265, 31
          %s268 = smul.addr %s267, 4
          %s269 = scalar_lea.vmem %s0, %s268
          %s270 = smul.u32 16, %s23
        $region20: #{tpu_custom_call.1} parent=15 // pred_fallthru
          _
        // Predicated region
        $region21: #{tpu_custom_call.1} parent=15 // pred_check
          %p271 = pneg %p81
        $region22: #{tpu_custom_call.1} parent=15 // pred_check_branch
          %273 = sbr.rel (%p271) target = $region24
        $region23: #{tpu_custom_call.1} parent=15 // pred_region
          %s274 = smul.u32 16, %s25
          %p275 = scmp.lt.s32.totalorder %s274, 31
          %s276 = scalar_select %p275, %s274, 31
          %s277 = smul.addr %s276, 4
          %s278 = scalar_lea.vmem %s1, %s277
          %s279 = smul.u32 16, %s25
        $region24: #{tpu_custom_call.1} parent=15 // pred_fallthru
          _
        // Predicated region
        $region25: #{tpu_custom_call.1} parent=15 // pred_check
          %p280 = pneg %p107
        $region26: #{tpu_custom_call.1} parent=15 // pred_check_branch
          %282 = sbr.rel (%p280) target = $region28
        $region27: #{tpu_custom_call.1} parent=15 // pred_region
          %s283 = smul.u32 16, %s25
          %p284 = scmp.lt.s32.totalorder %s283, 31
          %s285 = scalar_select %p284, %s283, 31
          %s286 = smul.addr %s285, 4
          %s287 = scalar_lea.vmem %s2, %s286
          %s288 = smul.u32 16, %s25
        $region28: #{tpu_custom_call.1} parent=15 // pred_fallthru
          _
        // Predicated region
        $region29: #{tpu_custom_call.1} parent=15 // pred_check
          %p289 = pneg %p133
        $region30: #{tpu_custom_call.1} parent=15 // pred_check_branch
          %291 = sbr.rel (%p289) target = $region32
        $region31: #{tpu_custom_call.1} parent=15 // pred_region
          %p292 = scmp.lt.s32.totalorder %s24, 3
          %s293 = scalar_select %p292, %s24, 3
          %s294 = smul.addr %s293, 16
          %s295 = smul.addr %s294, 4
          %s296 = scalar_lea.vmem %s3, %s295
        $region32: #{tpu_custom_call.1} parent=15 // pred_fallthru
          _
        // Predicated region
        $region33: #{tpu_custom_call.1} parent=15 // pred_check
          %p297 = pneg %p159
        $region34: #{tpu_custom_call.1} parent=15 // pred_check_branch
          %299 = sbr.rel (%p297) target = $region36
        $region35: #{tpu_custom_call.1} parent=15 // pred_region
          %p300 = scmp.lt.s32.totalorder %s24, 3
          %s301 = scalar_select %p300, %s24, 3
          %s302 = smul.addr %s301, 16
          %s303 = smul.addr %s302, 4
          %s304 = scalar_lea.vmem %s4, %s303
        $region36: #{tpu_custom_call.1} parent=15 // pred_fallthru
          _
        // Predicated region
        $region37: #{tpu_custom_call.1} parent=15 // pred_check
          %p305 = pneg %p185
        $region38: #{tpu_custom_call.1} parent=15 // pred_check_branch
          %307 = sbr.rel (%p305) target = $region40
        $region39: #{tpu_custom_call.1} parent=15 // pred_region
          %p308 = scmp.lt.s32.totalorder %s24, 3
          %s309 = scalar_select %p308, %s24, 3
          %s310 = smul.addr %s309, 16
          %s311 = smul.addr %s310, 4
          %s312 = scalar_lea.vmem %s5, %s311
        $region40: #{tpu_custom_call.1} parent=15 // pred_fallthru
          _
        // Predicated region
        $region41: #{tpu_custom_call.1} parent=15 // pred_check
          %p313 = pneg %p211
        $region42: #{tpu_custom_call.1} parent=15 // pred_check_branch
          %315 = sbr.rel (%p313) target = $region44
        $region43: #{tpu_custom_call.1} parent=15 // pred_region
          %p316 = scmp.lt.s32.totalorder %s24, 3
          %s317 = scalar_select %p316, %s24, 3
          %s318 = smul.addr %s317, 4
          %s319 = smul.addr %s318, 4
          %s320 = scalar_lea.vmem %s6, %s319
        $region44: #{tpu_custom_call.1} parent=15 // pred_fallthru
          _
      $region16: #{tpu_custom_call.1} parent=5 // pred_fallthru
        _
      %p321 = scmp.le.s32.totalorder 1, %s16
      %p322 = scmp.lt.s32.totalorder %s16, 17
      %p323 = pnand %p321, %p322
      %p324 = pneg %p323
      // Predicated region
      $region45: #{tpu_custom_call.1} parent=5 // pred_check
        _
      $region46: #{tpu_custom_call.1} parent=5 // pred_check_branch
        %326 = sbr.rel (%p323) target = $region48
      $region47: #{tpu_custom_call.1} parent=5 // pred_region
        %s327 = ssub.s32 %s16, 1
        %s328 = smul.u32 16, %s26
        %p329 = scmp.lt.s32.totalorder %s328, 31
        %s330 = scalar_select %p329, %s328, 31
        %s331 = smul.addr %s330, 4
        %s332 = scalar_lea.vmem %s0, %s331
        %p333 = pneg %p61
        %p334 = pneg %p58
        %s335 = smul.u32 16, %s28
        %p336 = scmp.lt.s32.totalorder %s335, 31
        %s337 = scalar_select %p336, %s335, 31
        %s338 = smul.addr %s337, 4
        %s339 = scalar_lea.vmem %s1, %s338
        %p340 = pneg %p87
        %p341 = pneg %p84
        %s342 = smul.u32 16, %s28
        %p343 = scmp.lt.s32.totalorder %s342, 31
        %s344 = scalar_select %p343, %s342, 31
        %s345 = smul.addr %s344, 4
        %s346 = scalar_lea.vmem %s2, %s345
        %p347 = pneg %p113
        %p348 = pneg %p110
        %p349 = scmp.lt.s32.totalorder %s27, 3
        %s350 = scalar_select %p349, %s27, 3
        %s351 = smul.addr %s350, 16
        %s352 = smul.addr %s351, 4
        %s353 = scalar_lea.vmem %s3, %s352
        %p354 = pneg %p139
        %p355 = pneg %p136
        %p356 = scmp.lt.s32.totalorder %s27, 3
        %s357 = scalar_select %p356, %s27, 3
        %s358 = smul.addr %s357, 16
        %s359 = smul.addr %s358, 4
        %s360 = scalar_lea.vmem %s4, %s359
        %p361 = pneg %p165
        %p362 = pneg %p162
        %p363 = scmp.lt.s32.totalorder %s27, 3
        %s364 = scalar_select %p363, %s27, 3
        %s365 = smul.addr %s364, 16
        %s366 = smul.addr %s365, 4
        %s367 = scalar_lea.vmem %s5, %s366
        %p368 = pneg %p191
        %p369 = pneg %p188
        %p370 = scmp.lt.s32.totalorder %s27, 3
        %s371 = scalar_select %p370, %s27, 3
        %s372 = smul.addr %s371, 4
        %s373 = smul.addr %s372, 4
        %s374 = scalar_lea.vmem %s6, %s373
        %p375 = pneg %p217
        %p376 = pneg %p214
        %p377 = pneg %p243
        %p378 = pneg %p240
        %s379 = sand.u32 %s230, 1
        %s380 = scalar_lea.sflag [#allocation8], %s379
        %s381 = sand.u32 %s230, 1
        %s382 = smul.addr %s381, 128
        %s383 = scalar_lea.vmem [#allocation7], %s382
        %s384 = smul.u32 16, %s26
        %p385 = scmp.lt.s32.totalorder %s384, 31
        %s386 = scalar_select %p385, %s384, 31
        %s387 = smul.addr %s386, 4
        %s388 = scalar_lea.vmem %s0, %s387
        %s389 = smul.u32 16, %s26
        %s390 = smul.u32 16, %s28
        %p391 = scmp.lt.s32.totalorder %s390, 31
        %s392 = scalar_select %p391, %s390, 31
        %s393 = smul.addr %s392, 4
        %s394 = scalar_lea.vmem %s1, %s393
        %s395 = smul.u32 16, %s28
        %s396 = smul.u32 16, %s28
        %p397 = scmp.lt.s32.totalorder %s396, 31
        %s398 = scalar_select %p397, %s396, 31
        %s399 = smul.addr %s398, 4
        %s400 = scalar_lea.vmem %s2, %s399
        %s401 = smul.u32 16, %s28
        %p402 = scmp.lt.s32.totalorder %s27, 3
        %s403 = scalar_select %p402, %s27, 3
        %s404 = smul.addr %s403, 16
        %s405 = smul.addr %s404, 4
        %s406 = scalar_lea.vmem %s3, %s405
        %p407 = scmp.lt.s32.totalorder %s27, 3
        %s408 = scalar_select %p407, %s27, 3
        %s409 = smul.addr %s408, 16
        %s410 = smul.addr %s409, 4
        %s411 = scalar_lea.vmem %s4, %s410
        %p412 = scmp.lt.s32.totalorder %s27, 3
        %s413 = scalar_select %p412, %s27, 3
        %s414 = smul.addr %s413, 16
        %s415 = smul.addr %s414, 4
        %s416 = scalar_lea.vmem %s5, %s415
        %p417 = scmp.lt.s32.totalorder %s27, 3
        %s418 = scalar_select %p417, %s27, 3
        %s419 = smul.addr %s418, 4
        %s420 = smul.addr %s419, 4
        %s421 = scalar_lea.vmem %s6, %s420
        %s422 = smul.u32 16, %s26
        %p424 = scmp.eq.s32.totalorder %s28, 0
        // Predicated region
        $region49: #{tpu_custom_call.1} parent=47 // pred_check
          %p425 = pneg %p424
        $region50: #{tpu_custom_call.1} parent=47 // pred_check_branch
          %427 = sbr.rel (%p425) target = $region52
        $region51: #{tpu_custom_call.1} parent=47 // pred_region
          %v428 = vld [vmem:[%s388] sm:$0xf]
          %v429 = vld [vmem:[%s388 + $0x4] sm:$0xf]
          %v430 = vld [vmem:[%s388 + $0x8] sm:$0xf]
          %v431 = vld [vmem:[%s388 + $0xc] sm:$0xf]
          %v432 = vld [vmem:[%s388 + $0x10] sm:$0xf]
          %v433 = vld [vmem:[%s388 + $0x14] sm:$0xf]
          %v434 = vld [vmem:[%s388 + $0x18] sm:$0xf]
          %v435 = vld [vmem:[%s388 + $0x1c] sm:$0xf]
          %v436 = vld [vmem:[%s388 + $0x20] sm:$0xf]
          %v437 = vld [vmem:[%s388 + $0x24] sm:$0xf]
          %v438 = vld [vmem:[%s388 + $0x28] sm:$0xf]
          %v439 = vld [vmem:[%s388 + $0x2c] sm:$0xf]
          %v440 = vld [vmem:[%s388 + $0x30] sm:$0xf]
          %v441 = vld [vmem:[%s388 + $0x34] sm:$0xf]
          %v442 = vld [vmem:[%s388 + $0x38] sm:$0xf]
          %v443 = vld [vmem:[%s388 + $0x3c] sm:$0xf]
          %v444 = vld [vmem:[%s406] sm:$0xf]
          %v445 = vld [vmem:[%s406 + $0x4] sm:$0xf]
          %v446 = vld [vmem:[%s406 + $0x8] sm:$0xf]
          %v447 = vld [vmem:[%s406 + $0xc] sm:$0xf]
          %v448 = vld [vmem:[%s406 + $0x10] sm:$0xf]
          %v449 = vld [vmem:[%s406 + $0x14] sm:$0xf]
          %v450 = vld [vmem:[%s406 + $0x18] sm:$0xf]
          %v451 = vld [vmem:[%s406 + $0x1c] sm:$0xf]
          %v452 = vld [vmem:[%s406 + $0x20] sm:$0xf]
          %v453 = vld [vmem:[%s406 + $0x24] sm:$0xf]
          %v454 = vld [vmem:[%s406 + $0x28] sm:$0xf]
          %v455 = vld [vmem:[%s406 + $0x2c] sm:$0xf]
          %v456 = vld [vmem:[%s406 + $0x30] sm:$0xf]
          %v457 = vld [vmem:[%s406 + $0x34] sm:$0xf]
          %v458 = vld [vmem:[%s406 + $0x38] sm:$0xf]
          %v459 = vld [vmem:[%s406 + $0x3c] sm:$0xf]
          %v476 = vunpack.c.l.b16 %v428
          %v477 = vunpack.c.l.b16 %v429
          %v478 = vunpack.c.l.b16 %v430
          %v479 = vunpack.c.l.b16 %v431
          %v480 = vunpack.c.l.b16 %v432
          %v481 = vunpack.c.l.b16 %v433
          %v482 = vunpack.c.l.b16 %v434
          %v483 = vunpack.c.l.b16 %v435
          %v484 = vunpack.c.l.b16 %v436
          %v485 = vunpack.c.l.b16 %v437
          %v486 = vunpack.c.l.b16 %v438
          %v487 = vunpack.c.l.b16 %v439
          %v488 = vunpack.c.l.b16 %v440
          %v489 = vunpack.c.l.b16 %v441
          %v490 = vunpack.c.l.b16 %v442
          %v491 = vunpack.c.l.b16 %v443
          %v492 = vpack.c.b16 %v477, %v476
          %v493 = vpack.c.b16 %v479, %v478
          %v494 = vpack.c.b16 %v481, %v480
          %v495 = vpack.c.b16 %v483, %v482
          %v496 = vpack.c.b16 %v485, %v484
          %v497 = vpack.c.b16 %v487, %v486
          %v498 = vpack.c.b16 %v489, %v488
          %v499 = vpack.c.b16 %v491, %v490
          %v524 = vunpack.c.l.b16 %v444
          %v525 = vunpack.c.l.b16 %v445
          %v526 = vunpack.c.l.b16 %v446
          %v527 = vunpack.c.l.b16 %v447
          %v528 = vunpack.c.l.b16 %v448
          %v529 = vunpack.c.l.b16 %v449
          %v530 = vunpack.c.l.b16 %v450
          %v531 = vunpack.c.l.b16 %v451
          %v532 = vunpack.c.l.b16 %v452
          %v533 = vunpack.c.l.b16 %v453
          %v534 = vunpack.c.l.b16 %v454
          %v535 = vunpack.c.l.b16 %v455
          %v536 = vunpack.c.l.b16 %v456
          %v537 = vunpack.c.l.b16 %v457
          %v538 = vunpack.c.l.b16 %v458
          %v539 = vunpack.c.l.b16 %v459
          %v540 = vpack.c.b16 %v525, %v524
          %v541 = vpack.c.b16 %v527, %v526
          %v542 = vpack.c.b16 %v529, %v528
          %v543 = vpack.c.b16 %v531, %v530
          %v544 = vpack.c.b16 %v533, %v532
          %v545 = vpack.c.b16 %v535, %v534
          %v546 = vpack.c.b16 %v537, %v536
          %v547 = vpack.c.b16 %v539, %v538
          %556 = vmatpush.bf16.msra.mxu0 %v547
          %557 = vmatpush.bf16.msra.mxu0 %v546
          %558 = vmatpush.bf16.msra.mxu0 %v545
          %559 = vmatpush.bf16.msra.mxu0 %v544
          %560 = vmatpush.bf16.msra.mxu0 %v543
          %561 = vmatpush.bf16.msra.mxu0 %v542
          %562 = vmatpush.bf16.msra.mxu0 %v541
          %563 = vmatpush.bf16.msra.mxu0 %v540
          %564 = vmatmul.bf16.gmra.mxu0 %v492
          %v565 = vpop.f32.mrf.mxu0
          %v566 = vadd.f32 0.0, %v565
          %v567 = vpop.f32.mrf.mxu0
          %v568 = vadd.f32 0.0, %v567
          %569 = vmatmul.bf16.gmra.mxu0 %v493
          %v570 = vpop.f32.mrf.mxu0
          %v571 = vadd.f32 0.0, %v570
          %v572 = vpop.f32.mrf.mxu0
          %v573 = vadd.f32 0.0, %v572
          %574 = vmatmul.bf16.gmra.mxu0 %v494
          %v575 = vpop.f32.mrf.mxu0
          %v576 = vadd.f32 0.0, %v575
          %v577 = vpop.f32.mrf.mxu0
          %v578 = vadd.f32 0.0, %v577
          %579 = vmatmul.bf16.gmra.mxu0 %v495
          %v580 = vpop.f32.mrf.mxu0
          %v581 = vadd.f32 0.0, %v580
          %v582 = vpop.f32.mrf.mxu0
          %v583 = vadd.f32 0.0, %v582
          %584 = vmatmul.bf16.gmra.mxu0 %v496
          %v585 = vpop.f32.mrf.mxu0
          %v586 = vadd.f32 0.0, %v585
          %v587 = vpop.f32.mrf.mxu0
          %v588 = vadd.f32 0.0, %v587
          %589 = vmatmul.bf16.gmra.mxu0 %v497
          %v590 = vpop.f32.mrf.mxu0
          %v591 = vadd.f32 0.0, %v590
          %v592 = vpop.f32.mrf.mxu0
          %v593 = vadd.f32 0.0, %v592
          %594 = vmatmul.bf16.gmra.mxu0 %v498
          %v595 = vpop.f32.mrf.mxu0
          %v596 = vadd.f32 0.0, %v595
          %v597 = vpop.f32.mrf.mxu0
          %v598 = vadd.f32 0.0, %v597
          %599 = vmatmul.bf16.gmra.mxu0 %v499
          %v600 = vpop.f32.mrf.mxu0
          %v601 = vadd.f32 0.0, %v600
          %v602 = vpop.f32.mrf.mxu0
          %v603 = vadd.f32 0.0, %v602
          %604 = vdwg.mxu0
          %v605 = vpack.c.bf16 %v566, %v566
          %v606 = vpack.c.bf16 %v568, %v568
          %v607 = vpack.c.bf16 %v571, %v571
          %v608 = vpack.c.bf16 %v573, %v573
          %v609 = vpack.c.bf16 %v576, %v576
          %v610 = vpack.c.bf16 %v578, %v578
          %v611 = vpack.c.bf16 %v581, %v581
          %v612 = vpack.c.bf16 %v583, %v583
          %v613 = vpack.c.bf16 %v586, %v586
          %v614 = vpack.c.bf16 %v588, %v588
          %v615 = vpack.c.bf16 %v591, %v591
          %v616 = vpack.c.bf16 %v593, %v593
          %v617 = vpack.c.bf16 %v596, %v596
          %v618 = vpack.c.bf16 %v598, %v598
          %v619 = vpack.c.bf16 %v601, %v601
          %v620 = vpack.c.bf16 %v603, %v603
          %vm621 = vcmask 257024
          %622 = vst.msk [vmem:[#allocation2] sm:$0xf] %vm621, %v605
          %623 = vst.msk [vmem:[#allocation2 + $0x4] sm:$0xf] %vm621, %v606
          %624 = vst.msk [vmem:[#allocation2 + $0x8] sm:$0xf] %vm621, %v607
          %625 = vst.msk [vmem:[#allocation2 + $0xc] sm:$0xf] %vm621, %v608
          %626 = vst.msk [vmem:[#allocation2 + $0x10] sm:$0xf] %vm621, %v609
          %627 = vst.msk [vmem:[#allocation2 + $0x14] sm:$0xf] %vm621, %v610
          %628 = vst.msk [vmem:[#allocation2 + $0x18] sm:$0xf] %vm621, %v611
          %629 = vst.msk [vmem:[#allocation2 + $0x1c] sm:$0xf] %vm621, %v612
          %630 = vst.msk [vmem:[#allocation2 + $0x20] sm:$0xf] %vm621, %v613
          %631 = vst.msk [vmem:[#allocation2 + $0x24] sm:$0xf] %vm621, %v614
          %632 = vst.msk [vmem:[#allocation2 + $0x28] sm:$0xf] %vm621, %v615
          %633 = vst.msk [vmem:[#allocation2 + $0x2c] sm:$0xf] %vm621, %v616
          %634 = vst.msk [vmem:[#allocation2 + $0x30] sm:$0xf] %vm621, %v617
          %635 = vst.msk [vmem:[#allocation2 + $0x34] sm:$0xf] %vm621, %v618
          %636 = vst.msk [vmem:[#allocation2 + $0x38] sm:$0xf] %vm621, %v619
          %637 = vst.msk [vmem:[#allocation2 + $0x3c] sm:$0xf] %vm621, %v620
          %vm638 = vcmask 7168
          %639 = vst.msk [vmem:[#allocation3] sm:$0xff] %vm638, -inf
          %640 = vst.msk [vmem:[#allocation3 + $0x8] sm:$0xff] %vm638, -inf
          %641 = vst.msk [vmem:[#allocation3 + $0x10] sm:$0xff] %vm638, -inf
          %642 = vst.msk [vmem:[#allocation3 + $0x18] sm:$0xff] %vm638, -inf
          %643 = vst.msk [vmem:[#allocation3 + $0x20] sm:$0xff] %vm638, -inf
          %644 = vst.msk [vmem:[#allocation3 + $0x28] sm:$0xff] %vm638, -inf
          %645 = vst.msk [vmem:[#allocation3 + $0x30] sm:$0xff] %vm638, -inf
          %646 = vst.msk [vmem:[#allocation3 + $0x38] sm:$0xff] %vm638, -inf
          %647 = vst.msk [vmem:[#allocation3 + $0x40] sm:$0xff] %vm638, -inf
          %648 = vst.msk [vmem:[#allocation3 + $0x48] sm:$0xff] %vm638, -inf
          %649 = vst.msk [vmem:[#allocation3 + $0x50] sm:$0xff] %vm638, -inf
          %650 = vst.msk [vmem:[#allocation3 + $0x58] sm:$0xff] %vm638, -inf
          %651 = vst.msk [vmem:[#allocation3 + $0x60] sm:$0xff] %vm638, -inf
          %652 = vst.msk [vmem:[#allocation3 + $0x68] sm:$0xff] %vm638, -inf
          %653 = vst.msk [vmem:[#allocation3 + $0x70] sm:$0xff] %vm638, -inf
          %654 = vst.msk [vmem:[#allocation3 + $0x78] sm:$0xff] %vm638, -inf
          %655 = vst.msk [vmem:[#allocation4] sm:$0xff] %vm638, 0.0
          %656 = vst.msk [vmem:[#allocation4 + $0x8] sm:$0xff] %vm638, 0.0
          %657 = vst.msk [vmem:[#allocation4 + $0x10] sm:$0xff] %vm638, 0.0
          %658 = vst.msk [vmem:[#allocation4 + $0x18] sm:$0xff] %vm638, 0.0
          %659 = vst.msk [vmem:[#allocation4 + $0x20] sm:$0xff] %vm638, 0.0
          %660 = vst.msk [vmem:[#allocation4 + $0x28] sm:$0xff] %vm638, 0.0
          %661 = vst.msk [vmem:[#allocation4 + $0x30] sm:$0xff] %vm638, 0.0
          %662 = vst.msk [vmem:[#allocation4 + $0x38] sm:$0xff] %vm638, 0.0
          %663 = vst.msk [vmem:[#allocation4 + $0x40] sm:$0xff] %vm638, 0.0
          %664 = vst.msk [vmem:[#allocation4 + $0x48] sm:$0xff] %vm638, 0.0
          %665 = vst.msk [vmem:[#allocation4 + $0x50] sm:$0xff] %vm638, 0.0
          %666 = vst.msk [vmem:[#allocation4 + $0x58] sm:$0xff] %vm638, 0.0
          %667 = vst.msk [vmem:[#allocation4 + $0x60] sm:$0xff] %vm638, 0.0
          %668 = vst.msk [vmem:[#allocation4 + $0x68] sm:$0xff] %vm638, 0.0
          %669 = vst.msk [vmem:[#allocation4 + $0x70] sm:$0xff] %vm638, 0.0
          %670 = vst.msk [vmem:[#allocation4 + $0x78] sm:$0xff] %vm638, 0.0
          %vm671 = vcmask 261120
          %672 = vst.msk [vmem:[#allocation5] sm:$0xff] %vm671, 0.0
          %673 = vst.msk [vmem:[#allocation5 + $0x8] sm:$0xff] %vm671, 0.0
          %674 = vst.msk [vmem:[#allocation5 + $0x10] sm:$0xff] %vm671, 0.0
          %675 = vst.msk [vmem:[#allocation5 + $0x18] sm:$0xff] %vm671, 0.0
          %676 = vst.msk [vmem:[#allocation5 + $0x20] sm:$0xff] %vm671, 0.0
          %677 = vst.msk [vmem:[#allocation5 + $0x28] sm:$0xff] %vm671, 0.0
          %678 = vst.msk [vmem:[#allocation5 + $0x30] sm:$0xff] %vm671, 0.0
          %679 = vst.msk [vmem:[#allocation5 + $0x38] sm:$0xff] %vm671, 0.0
          %680 = vst.msk [vmem:[#allocation5 + $0x40] sm:$0xff] %vm671, 0.0
          %681 = vst.msk [vmem:[#allocation5 + $0x48] sm:$0xff] %vm671, 0.0
          %682 = vst.msk [vmem:[#allocation5 + $0x50] sm:$0xff] %vm671, 0.0
          %683 = vst.msk [vmem:[#allocation5 + $0x58] sm:$0xff] %vm671, 0.0
          %684 = vst.msk [vmem:[#allocation5 + $0x60] sm:$0xff] %vm671, 0.0
          %685 = vst.msk [vmem:[#allocation5 + $0x68] sm:$0xff] %vm671, 0.0
          %686 = vst.msk [vmem:[#allocation5 + $0x70] sm:$0xff] %vm671, 0.0
          %687 = vst.msk [vmem:[#allocation5 + $0x78] sm:$0xff] %vm671, 0.0
        $region52: #{tpu_custom_call.1} parent=47 // pred_fallthru
          _
        %v688 = vld [vmem:[%s394] sm:$0xf]
        %v689 = vld [vmem:[%s394 + $0x4] sm:$0xf]
        %v690 = vld [vmem:[%s394 + $0x8] sm:$0xf]
        %v691 = vld [vmem:[%s394 + $0xc] sm:$0xf]
        %v692 = vld [vmem:[%s394 + $0x10] sm:$0xf]
        %v693 = vld [vmem:[%s394 + $0x14] sm:$0xf]
        %v694 = vld [vmem:[%s394 + $0x18] sm:$0xf]
        %v695 = vld [vmem:[%s394 + $0x1c] sm:$0xf]
        %v696 = vld [vmem:[%s394 + $0x20] sm:$0xf]
        %v697 = vld [vmem:[%s394 + $0x24] sm:$0xf]
        %v698 = vld [vmem:[%s394 + $0x28] sm:$0xf]
        %v699 = vld [vmem:[%s394 + $0x2c] sm:$0xf]
        %v700 = vld [vmem:[%s394 + $0x30] sm:$0xf]
        %v701 = vld [vmem:[%s394 + $0x34] sm:$0xf]
        %v702 = vld [vmem:[%s394 + $0x38] sm:$0xf]
        %v703 = vld [vmem:[%s394 + $0x3c] sm:$0xf]
        %v704 = vld [vmem:[%s411] sm:$0xf]
        %v705 = vld [vmem:[%s411 + $0x4] sm:$0xf]
        %v706 = vld [vmem:[%s411 + $0x8] sm:$0xf]
        %v707 = vld [vmem:[%s411 + $0xc] sm:$0xf]
        %v708 = vld [vmem:[%s411 + $0x10] sm:$0xf]
        %v709 = vld [vmem:[%s411 + $0x14] sm:$0xf]
        %v710 = vld [vmem:[%s411 + $0x18] sm:$0xf]
        %v711 = vld [vmem:[%s411 + $0x1c] sm:$0xf]
        %v712 = vld [vmem:[%s411 + $0x20] sm:$0xf]
        %v713 = vld [vmem:[%s411 + $0x24] sm:$0xf]
        %v714 = vld [vmem:[%s411 + $0x28] sm:$0xf]
        %v715 = vld [vmem:[%s411 + $0x2c] sm:$0xf]
        %v716 = vld [vmem:[%s411 + $0x30] sm:$0xf]
        %v717 = vld [vmem:[%s411 + $0x34] sm:$0xf]
        %v718 = vld [vmem:[%s411 + $0x38] sm:$0xf]
        %v719 = vld [vmem:[%s411 + $0x3c] sm:$0xf]
        %v736 = vunpack.c.l.b16 %v688
        %v737 = vunpack.c.l.b16 %v689
        %v738 = vunpack.c.l.b16 %v690
        %v739 = vunpack.c.l.b16 %v691
        %v740 = vunpack.c.l.b16 %v692
        %v741 = vunpack.c.l.b16 %v693
        %v742 = vunpack.c.l.b16 %v694
        %v743 = vunpack.c.l.b16 %v695
        %v744 = vunpack.c.l.b16 %v696
        %v745 = vunpack.c.l.b16 %v697
        %v746 = vunpack.c.l.b16 %v698
        %v747 = vunpack.c.l.b16 %v699
        %v748 = vunpack.c.l.b16 %v700
        %v749 = vunpack.c.l.b16 %v701
        %v750 = vunpack.c.l.b16 %v702
        %v751 = vunpack.c.l.b16 %v703
        %v752 = vpack.c.b16 %v737, %v736
        %v753 = vpack.c.b16 %v739, %v738
        %v754 = vpack.c.b16 %v741, %v740
        %v755 = vpack.c.b16 %v743, %v742
        %v756 = vpack.c.b16 %v745, %v744
        %v757 = vpack.c.b16 %v747, %v746
        %v758 = vpack.c.b16 %v749, %v748
        %v759 = vpack.c.b16 %v751, %v750
        %v784 = vunpack.c.l.b16 %v704
        %v785 = vunpack.c.l.b16 %v705
        %v786 = vunpack.c.l.b16 %v706
        %v787 = vunpack.c.l.b16 %v707
        %v788 = vunpack.c.l.b16 %v708
        %v789 = vunpack.c.l.b16 %v709
        %v790 = vunpack.c.l.b16 %v710
        %v791 = vunpack.c.l.b16 %v711
        %v792 = vunpack.c.l.b16 %v712
        %v793 = vunpack.c.l.b16 %v713
        %v794 = vunpack.c.l.b16 %v714
        %v795 = vunpack.c.l.b16 %v715
        %v796 = vunpack.c.l.b16 %v716
        %v797 = vunpack.c.l.b16 %v717
        %v798 = vunpack.c.l.b16 %v718
        %v799 = vunpack.c.l.b16 %v719
        %v800 = vpack.c.b16 %v785, %v784
        %v801 = vpack.c.b16 %v787, %v786
        %v802 = vpack.c.b16 %v789, %v788
        %v803 = vpack.c.b16 %v791, %v790
        %v804 = vpack.c.b16 %v793, %v792
        %v805 = vpack.c.b16 %v795, %v794
        %v806 = vpack.c.b16 %v797, %v796
        %v807 = vpack.c.b16 %v799, %v798
        %816 = vmatpush.bf16.msra.mxu0 %v807
        %817 = vmatpush.bf16.msra.mxu0 %v806
        %818 = vmatpush.bf16.msra.mxu0 %v805
        %819 = vmatpush.bf16.msra.mxu0 %v804
        %820 = vmatpush.bf16.msra.mxu0 %v803
        %821 = vmatpush.bf16.msra.mxu0 %v802
        %822 = vmatpush.bf16.msra.mxu0 %v801
        %823 = vmatpush.bf16.msra.mxu0 %v800
        %824 = vmatmul.bf16.gmra.mxu0 %v752
        %v825 = vpop.f32.mrf.mxu0
        %v826 = vadd.f32 0.0, %v825
        %v827 = vpop.f32.mrf.mxu0
        %v828 = vadd.f32 0.0, %v827
        %829 = vmatmul.bf16.gmra.mxu0 %v753
        %v830 = vpop.f32.mrf.mxu0
        %v831 = vadd.f32 0.0, %v830
        %v832 = vpop.f32.mrf.mxu0
        %v833 = vadd.f32 0.0, %v832
        %834 = vmatmul.bf16.gmra.mxu0 %v754
        %v835 = vpop.f32.mrf.mxu0
        %v836 = vadd.f32 0.0, %v835
        %v837 = vpop.f32.mrf.mxu0
        %v838 = vadd.f32 0.0, %v837
        %839 = vmatmul.bf16.gmra.mxu0 %v755
        %v840 = vpop.f32.mrf.mxu0
        %v841 = vadd.f32 0.0, %v840
        %v842 = vpop.f32.mrf.mxu0
        %v843 = vadd.f32 0.0, %v842
        %844 = vmatmul.bf16.gmra.mxu0 %v756
        %v845 = vpop.f32.mrf.mxu0
        %v846 = vadd.f32 0.0, %v845
        %v847 = vpop.f32.mrf.mxu0
        %v848 = vadd.f32 0.0, %v847
        %849 = vmatmul.bf16.gmra.mxu0 %v757
        %v850 = vpop.f32.mrf.mxu0
        %v851 = vadd.f32 0.0, %v850
        %v852 = vpop.f32.mrf.mxu0
        %v853 = vadd.f32 0.0, %v852
        %854 = vmatmul.bf16.gmra.mxu0 %v758
        %v855 = vpop.f32.mrf.mxu0
        %v856 = vadd.f32 0.0, %v855
        %v857 = vpop.f32.mrf.mxu0
        %v858 = vadd.f32 0.0, %v857
        %859 = vmatmul.bf16.gmra.mxu0 %v759
        %v860 = vpop.f32.mrf.mxu0
        %v861 = vadd.f32 0.0, %v860
        %v862 = vpop.f32.mrf.mxu0
        %v863 = vadd.f32 0.0, %v862
        %864 = vdwg.mxu0
        %v865 = vld [vmem:[%s400] sm:$0xf]
        %v866 = vld [vmem:[%s400 + $0x4] sm:$0xf]
        %v867 = vld [vmem:[%s400 + $0x8] sm:$0xf]
        %v868 = vld [vmem:[%s400 + $0xc] sm:$0xf]
        %v869 = vld [vmem:[%s400 + $0x10] sm:$0xf]
        %v870 = vld [vmem:[%s400 + $0x14] sm:$0xf]
        %v871 = vld [vmem:[%s400 + $0x18] sm:$0xf]
        %v872 = vld [vmem:[%s400 + $0x1c] sm:$0xf]
        %v873 = vld [vmem:[%s400 + $0x20] sm:$0xf]
        %v874 = vld [vmem:[%s400 + $0x24] sm:$0xf]
        %v875 = vld [vmem:[%s400 + $0x28] sm:$0xf]
        %v876 = vld [vmem:[%s400 + $0x2c] sm:$0xf]
        %v877 = vld [vmem:[%s400 + $0x30] sm:$0xf]
        %v878 = vld [vmem:[%s400 + $0x34] sm:$0xf]
        %v879 = vld [vmem:[%s400 + $0x38] sm:$0xf]
        %v880 = vld [vmem:[%s400 + $0x3c] sm:$0xf]
        %v881 = vld [vmem:[%s416] sm:$0xf]
        %v882 = vld [vmem:[%s416 + $0x4] sm:$0xf]
        %v883 = vld [vmem:[%s416 + $0x8] sm:$0xf]
        %v884 = vld [vmem:[%s416 + $0xc] sm:$0xf]
        %v885 = vld [vmem:[%s416 + $0x10] sm:$0xf]
        %v886 = vld [vmem:[%s416 + $0x14] sm:$0xf]
        %v887 = vld [vmem:[%s416 + $0x18] sm:$0xf]
        %v888 = vld [vmem:[%s416 + $0x1c] sm:$0xf]
        %v889 = vld [vmem:[%s416 + $0x20] sm:$0xf]
        %v890 = vld [vmem:[%s416 + $0x24] sm:$0xf]
        %v891 = vld [vmem:[%s416 + $0x28] sm:$0xf]
        %v892 = vld [vmem:[%s416 + $0x2c] sm:$0xf]
        %v893 = vld [vmem:[%s416 + $0x30] sm:$0xf]
        %v894 = vld [vmem:[%s416 + $0x34] sm:$0xf]
        %v895 = vld [vmem:[%s416 + $0x38] sm:$0xf]
        %v896 = vld [vmem:[%s416 + $0x3c] sm:$0xf]
        %v913 = vunpack.c.l.b16 %v865
        %v914 = vunpack.c.l.b16 %v866
        %v915 = vunpack.c.l.b16 %v867
        %v916 = vunpack.c.l.b16 %v868
        %v917 = vunpack.c.l.b16 %v869
        %v918 = vunpack.c.l.b16 %v870
        %v919 = vunpack.c.l.b16 %v871
        %v920 = vunpack.c.l.b16 %v872
        %v921 = vunpack.c.l.b16 %v873
        %v922 = vunpack.c.l.b16 %v874
        %v923 = vunpack.c.l.b16 %v875
        %v924 = vunpack.c.l.b16 %v876
        %v925 = vunpack.c.l.b16 %v877
        %v926 = vunpack.c.l.b16 %v878
        %v927 = vunpack.c.l.b16 %v879
        %v928 = vunpack.c.l.b16 %v880
        %v929 = vpack.c.b16 %v914, %v913
        %v930 = vpack.c.b16 %v916, %v915
        %v931 = vpack.c.b16 %v918, %v917
        %v932 = vpack.c.b16 %v920, %v919
        %v933 = vpack.c.b16 %v922, %v921
        %v934 = vpack.c.b16 %v924, %v923
        %v935 = vpack.c.b16 %v926, %v925
        %v936 = vpack.c.b16 %v928, %v927
        %v961 = vunpack.c.l.b16 %v881
        %v962 = vunpack.c.l.b16 %v882
        %v963 = vunpack.c.l.b16 %v883
        %v964 = vunpack.c.l.b16 %v884
        %v965 = vunpack.c.l.b16 %v885
        %v966 = vunpack.c.l.b16 %v886
        %v967 = vunpack.c.l.b16 %v887
        %v968 = vunpack.c.l.b16 %v888
        %v969 = vunpack.c.l.b16 %v889
        %v970 = vunpack.c.l.b16 %v890
        %v971 = vunpack.c.l.b16 %v891
        %v972 = vunpack.c.l.b16 %v892
        %v973 = vunpack.c.l.b16 %v893
        %v974 = vunpack.c.l.b16 %v894
        %v975 = vunpack.c.l.b16 %v895
        %v976 = vunpack.c.l.b16 %v896
        %v977 = vpack.c.b16 %v962, %v961
        %v978 = vpack.c.b16 %v964, %v963
        %v979 = vpack.c.b16 %v966, %v965
        %v980 = vpack.c.b16 %v968, %v967
        %v981 = vpack.c.b16 %v970, %v969
        %v982 = vpack.c.b16 %v972, %v971
        %v983 = vpack.c.b16 %v974, %v973
        %v984 = vpack.c.b16 %v976, %v975
        %993 = vmatpush.bf16.msra.mxu0 %v984
        %994 = vmatpush.bf16.msra.mxu0 %v983
        %995 = vmatpush.bf16.msra.mxu0 %v982
        %996 = vmatpush.bf16.msra.mxu0 %v981
        %997 = vmatpush.bf16.msra.mxu0 %v980
        %998 = vmatpush.bf16.msra.mxu0 %v979
        %999 = vmatpush.bf16.msra.mxu0 %v978
        %1000 = vmatpush.bf16.msra.mxu0 %v977
        %1001 = vmatmul.bf16.gmra.mxu0 %v929
        %v1002 = vpop.f32.mrf.mxu0
        %v1003 = vadd.f32 0.0, %v1002
        %v1004 = vpop.f32.mrf.mxu0
        %v1005 = vadd.f32 0.0, %v1004
        %1006 = vmatmul.bf16.gmra.mxu0 %v930
        %v1007 = vpop.f32.mrf.mxu0
        %v1008 = vadd.f32 0.0, %v1007
        %v1009 = vpop.f32.mrf.mxu0
        %v1010 = vadd.f32 0.0, %v1009
        %1011 = vmatmul.bf16.gmra.mxu0 %v931
        %v1012 = vpop.f32.mrf.mxu0
        %v1013 = vadd.f32 0.0, %v1012
        %v1014 = vpop.f32.mrf.mxu0
        %v1015 = vadd.f32 0.0, %v1014
        %1016 = vmatmul.bf16.gmra.mxu0 %v932
        %v1017 = vpop.f32.mrf.mxu0
        %v1018 = vadd.f32 0.0, %v1017
        %v1019 = vpop.f32.mrf.mxu0
        %v1020 = vadd.f32 0.0, %v1019
        %1021 = vmatmul.bf16.gmra.mxu0 %v933
        %v1022 = vpop.f32.mrf.mxu0
        %v1023 = vadd.f32 0.0, %v1022
        %v1024 = vpop.f32.mrf.mxu0
        %v1025 = vadd.f32 0.0, %v1024
        %1026 = vmatmul.bf16.gmra.mxu0 %v934
        %v1027 = vpop.f32.mrf.mxu0
        %v1028 = vadd.f32 0.0, %v1027
        %v1029 = vpop.f32.mrf.mxu0
        %v1030 = vadd.f32 0.0, %v1029
        %1031 = vmatmul.bf16.gmra.mxu0 %v935
        %v1032 = vpop.f32.mrf.mxu0
        %v1033 = vadd.f32 0.0, %v1032
        %v1034 = vpop.f32.mrf.mxu0
        %v1035 = vadd.f32 0.0, %v1034
        %1036 = vmatmul.bf16.gmra.mxu0 %v936
        %v1037 = vpop.f32.mrf.mxu0
        %v1038 = vadd.f32 0.0, %v1037
        %v1039 = vpop.f32.mrf.mxu0
        %v1040 = vadd.f32 0.0, %v1039
        %1041 = vdwg.mxu0
        %v1042 = vld [vmem:[#allocation2] sm:$0xf]
        %v1043 = vld [vmem:[#allocation2 + $0x4] sm:$0xf]
        %v1044 = vld [vmem:[#allocation2 + $0x8] sm:$0xf]
        %v1045 = vld [vmem:[#allocation2 + $0xc] sm:$0xf]
        %v1046 = vld [vmem:[#allocation2 + $0x10] sm:$0xf]
        %v1047 = vld [vmem:[#allocation2 + $0x14] sm:$0xf]
        %v1048 = vld [vmem:[#allocation2 + $0x18] sm:$0xf]
        %v1049 = vld [vmem:[#allocation2 + $0x1c] sm:$0xf]
        %v1050 = vld [vmem:[#allocation2 + $0x20] sm:$0xf]
        %v1051 = vld [vmem:[#allocation2 + $0x24] sm:$0xf]
        %v1052 = vld [vmem:[#allocation2 + $0x28] sm:$0xf]
        %v1053 = vld [vmem:[#allocation2 + $0x2c] sm:$0xf]
        %v1054 = vld [vmem:[#allocation2 + $0x30] sm:$0xf]
        %v1055 = vld [vmem:[#allocation2 + $0x34] sm:$0xf]
        %v1056 = vld [vmem:[#allocation2 + $0x38] sm:$0xf]
        %v1057 = vld [vmem:[#allocation2 + $0x3c] sm:$0xf]
        %v1058 = vpack.c.bf16 %v828, %v826
        %v1059 = vpack.c.bf16 %v833, %v831
        %v1060 = vpack.c.bf16 %v838, %v836
        %v1061 = vpack.c.bf16 %v843, %v841
        %v1062 = vpack.c.bf16 %v848, %v846
        %v1063 = vpack.c.bf16 %v853, %v851
        %v1064 = vpack.c.bf16 %v858, %v856
        %v1065 = vpack.c.bf16 %v863, %v861
        %v1082 = vunpack.c.l.b16 %v1042
        %v1083 = vunpack.c.l.b16 %v1043
        %v1084 = vunpack.c.l.b16 %v1044
        %v1085 = vunpack.c.l.b16 %v1045
        %v1086 = vunpack.c.l.b16 %v1046
        %v1087 = vunpack.c.l.b16 %v1047
        %v1088 = vunpack.c.l.b16 %v1048
        %v1089 = vunpack.c.l.b16 %v1049
        %v1090 = vunpack.c.l.b16 %v1050
        %v1091 = vunpack.c.l.b16 %v1051
        %v1092 = vunpack.c.l.b16 %v1052
        %v1093 = vunpack.c.l.b16 %v1053
        %v1094 = vunpack.c.l.b16 %v1054
        %v1095 = vunpack.c.l.b16 %v1055
        %v1096 = vunpack.c.l.b16 %v1056
        %v1097 = vunpack.c.l.b16 %v1057
        %v1098 = vpack.c.b16 %v1083, %v1082
        %v1099 = vpack.c.b16 %v1085, %v1084
        %v1100 = vpack.c.b16 %v1087, %v1086
        %v1101 = vpack.c.b16 %v1089, %v1088
        %v1102 = vpack.c.b16 %v1091, %v1090
        %v1103 = vpack.c.b16 %v1093, %v1092
        %v1104 = vpack.c.b16 %v1095, %v1094
        %v1105 = vpack.c.b16 %v1097, %v1096
        %vm1106 = vcmask 261120
        %v1108 = vsel %vm1106, %v1098, 0
        %v1111 = vsel %vm1106, %v1099, 0
        %v1114 = vsel %vm1106, %v1100, 0
        %v1117 = vsel %vm1106, %v1101, 0
        %v1120 = vsel %vm1106, %v1102, 0
        %v1123 = vsel %vm1106, %v1103, 0
        %v1126 = vsel %vm1106, %v1104, 0
        %v1129 = vsel %vm1106, %v1105, 0
        %v1132 = vsel %vm1106, %v1058, 0
        %v1135 = vsel %vm1106, %v1059, 0
        %v1138 = vsel %vm1106, %v1060, 0
        %v1141 = vsel %vm1106, %v1061, 0
        %v1144 = vsel %vm1106, %v1062, 0
        %v1147 = vsel %vm1106, %v1063, 0
        %v1150 = vsel %vm1106, %v1064, 0
        %v1153 = vsel %vm1106, %v1065, 0
        %1155 = vmatpush.bf16.xpose.msra.mxu0 %v1153
        %1156 = vmatpush.bf16.xpose.msra.mxu0 %v1150
        %1157 = vmatpush.bf16.xpose.msra.mxu0 %v1147
        %1158 = vmatpush.bf16.xpose.msra.mxu0 %v1144
        %1159 = vmatpush.bf16.xpose.msra.mxu0 %v1141
        %1160 = vmatpush.bf16.xpose.msra.mxu0 %v1138
        %1161 = vmatpush.bf16.xpose.msra.mxu0 %v1135
        %1162 = vmatpush.bf16.xpose.msra.mxu0 %v1132
        %1163 = vmatmul.bf16.gmra.mxu0 %v1108
        %v1164 = vpop.f32.mrf.mxu0
        %v1165 = vadd.f32 0.0, %v1164
        %v1166 = vpop.f32.mrf.mxu0
        %v1167 = vadd.f32 0.0, %v1166
        %1168 = vmatmul.bf16.gmra.mxu0 %v1111
        %v1169 = vpop.f32.mrf.mxu0
        %v1170 = vadd.f32 0.0, %v1169
        %v1171 = vpop.f32.mrf.mxu0
        %v1172 = vadd.f32 0.0, %v1171
        %1173 = vmatmul.bf16.gmra.mxu0 %v1114
        %v1174 = vpop.f32.mrf.mxu0
        %v1175 = vadd.f32 0.0, %v1174
        %v1176 = vpop.f32.mrf.mxu0
        %v1177 = vadd.f32 0.0, %v1176
        %1178 = vmatmul.bf16.gmra.mxu0 %v1117
        %v1179 = vpop.f32.mrf.mxu0
        %v1180 = vadd.f32 0.0, %v1179
        %v1181 = vpop.f32.mrf.mxu0
        %v1182 = vadd.f32 0.0, %v1181
        %1183 = vmatmul.bf16.gmra.mxu0 %v1120
        %v1184 = vpop.f32.mrf.mxu0
        %v1185 = vadd.f32 0.0, %v1184
        %v1186 = vpop.f32.mrf.mxu0
        %v1187 = vadd.f32 0.0, %v1186
        %1188 = vmatmul.bf16.gmra.mxu0 %v1123
        %v1189 = vpop.f32.mrf.mxu0
        %v1190 = vadd.f32 0.0, %v1189
        %v1191 = vpop.f32.mrf.mxu0
        %v1192 = vadd.f32 0.0, %v1191
        %1193 = vmatmul.bf16.gmra.mxu0 %v1126
        %v1194 = vpop.f32.mrf.mxu0
        %v1195 = vadd.f32 0.0, %v1194
        %v1196 = vpop.f32.mrf.mxu0
        %v1197 = vadd.f32 0.0, %v1196
        %1198 = vmatmul.bf16.gmra.mxu0 %v1129
        %v1199 = vpop.f32.mrf.mxu0
        %v1200 = vadd.f32 0.0, %v1199
        %v1201 = vpop.f32.mrf.mxu0
        %v1202 = vadd.f32 0.0, %v1201
        %1203 = vdwg.mxu0
        %v1204 = vld [vmem:[#allocation3] sm:$0xff]
        %v1205 = vld [vmem:[#allocation3 + $0x8] sm:$0xff]
        %v1206 = vld [vmem:[#allocation3 + $0x10] sm:$0xff]
        %v1207 = vld [vmem:[#allocation3 + $0x18] sm:$0xff]
        %v1208 = vld [vmem:[#allocation3 + $0x20] sm:$0xff]
        %v1209 = vld [vmem:[#allocation3 + $0x28] sm:$0xff]
        %v1210 = vld [vmem:[#allocation3 + $0x30] sm:$0xff]
        %v1211 = vld [vmem:[#allocation3 + $0x38] sm:$0xff]
        %v1212 = vld [vmem:[#allocation3 + $0x40] sm:$0xff]
        %v1213 = vld [vmem:[#allocation3 + $0x48] sm:$0xff]
        %v1214 = vld [vmem:[#allocation3 + $0x50] sm:$0xff]
        %v1215 = vld [vmem:[#allocation3 + $0x58] sm:$0xff]
        %v1216 = vld [vmem:[#allocation3 + $0x60] sm:$0xff]
        %v1217 = vld [vmem:[#allocation3 + $0x68] sm:$0xff]
        %v1218 = vld [vmem:[#allocation3 + $0x70] sm:$0xff]
        %v1219 = vld [vmem:[#allocation3 + $0x78] sm:$0xff]
        %1220 = vmax.xlane.f32.xlu0 %v1165
        %v1221 = vpop.xlane.xlu0 %1220
        %1222 = vmax.xlane.f32.xlu0 %v1167
        %v1223 = vpop.xlane.xlu0 %1222
        %1224 = vmax.xlane.f32.xlu0 %v1170
        %v1225 = vpop.xlane.xlu0 %1224
        %1226 = vmax.xlane.f32.xlu0 %v1172
        %v1227 = vpop.xlane.xlu0 %1226
        %1228 = vmax.xlane.f32.xlu0 %v1175
        %v1229 = vpop.xlane.xlu0 %1228
        %1230 = vmax.xlane.f32.xlu0 %v1177
        %v1231 = vpop.xlane.xlu0 %1230
        %1232 = vmax.xlane.f32.xlu0 %v1180
        %v1233 = vpop.xlane.xlu0 %1232
        %1234 = vmax.xlane.f32.xlu0 %v1182
        %v1235 = vpop.xlane.xlu0 %1234
        %1236 = vmax.xlane.f32.xlu0 %v1185
        %v1237 = vpop.xlane.xlu0 %1236
        %1238 = vmax.xlane.f32.xlu0 %v1187
        %v1239 = vpop.xlane.xlu0 %1238
        %1240 = vmax.xlane.f32.xlu0 %v1190
        %v1241 = vpop.xlane.xlu0 %1240
        %1242 = vmax.xlane.f32.xlu0 %v1192
        %v1243 = vpop.xlane.xlu0 %1242
        %1244 = vmax.xlane.f32.xlu0 %v1195
        %v1245 = vpop.xlane.xlu0 %1244
        %1246 = vmax.xlane.f32.xlu0 %v1197
        %v1247 = vpop.xlane.xlu0 %1246
        %1248 = vmax.xlane.f32.xlu0 %v1200
        %v1249 = vpop.xlane.xlu0 %1248
        %1250 = vmax.xlane.f32.xlu0 %v1202
        %v1251 = vpop.xlane.xlu0 %1250
        %v1252 = vmax.f32 %v1204, %v1221
        %v1253 = vmax.f32 %v1205, %v1223
        %v1254 = vmax.f32 %v1206, %v1225
        %v1255 = vmax.f32 %v1207, %v1227
        %v1256 = vmax.f32 %v1208, %v1229
        %v1257 = vmax.f32 %v1209, %v1231
        %v1258 = vmax.f32 %v1210, %v1233
        %v1259 = vmax.f32 %v1211, %v1235
        %v1260 = vmax.f32 %v1212, %v1237
        %v1261 = vmax.f32 %v1213, %v1239
        %v1262 = vmax.f32 %v1214, %v1241
        %v1263 = vmax.f32 %v1215, %v1243
        %v1264 = vmax.f32 %v1216, %v1245
        %v1265 = vmax.f32 %v1217, %v1247
        %v1266 = vmax.f32 %v1218, %v1249
        %v1267 = vmax.f32 %v1219, %v1251
        %v1268 = vsub.f32 %v1204, %v1252
        %v1269 = vsub.f32 %v1205, %v1253
        %v1270 = vsub.f32 %v1206, %v1254
        %v1271 = vsub.f32 %v1207, %v1255
        %v1272 = vsub.f32 %v1208, %v1256
        %v1273 = vsub.f32 %v1209, %v1257
        %v1274 = vsub.f32 %v1210, %v1258
        %v1275 = vsub.f32 %v1211, %v1259
        %v1276 = vsub.f32 %v1212, %v1260
        %v1277 = vsub.f32 %v1213, %v1261
        %v1278 = vsub.f32 %v1214, %v1262
        %v1279 = vsub.f32 %v1215, %v1263
        %v1280 = vsub.f32 %v1216, %v1264
        %v1281 = vsub.f32 %v1217, %v1265
        %v1282 = vsub.f32 %v1218, %v1266
        %v1283 = vsub.f32 %v1219, %v1267
        %v1284 = vmul.f32 %v1268, 1.442695
        %v1285 = vpow.pop %v1284
        %v1286 = vmul.f32 %v1269, 1.442695
        %v1287 = vpow.pop %v1286
        %v1288 = vmul.f32 %v1270, 1.442695
        %v1289 = vpow.pop %v1288
        %v1290 = vmul.f32 %v1271, 1.442695
        %v1291 = vpow.pop %v1290
        %v1292 = vmul.f32 %v1272, 1.442695
        %v1293 = vpow.pop %v1292
        %v1294 = vmul.f32 %v1273, 1.442695
        %v1295 = vpow.pop %v1294
        %v1296 = vmul.f32 %v1274, 1.442695
        %v1297 = vpow.pop %v1296
        %v1298 = vmul.f32 %v1275, 1.442695
        %v1299 = vpow.pop %v1298
        %v1300 = vmul.f32 %v1276, 1.442695
        %v1301 = vpow.pop %v1300
        %v1302 = vmul.f32 %v1277, 1.442695
        %v1303 = vpow.pop %v1302
        %v1304 = vmul.f32 %v1278, 1.442695
        %v1305 = vpow.pop %v1304
        %v1306 = vmul.f32 %v1279, 1.442695
        %v1307 = vpow.pop %v1306
        %v1308 = vmul.f32 %v1280, 1.442695
        %v1309 = vpow.pop %v1308
        %v1310 = vmul.f32 %v1281, 1.442695
        %v1311 = vpow.pop %v1310
        %v1312 = vmul.f32 %v1282, 1.442695
        %v1313 = vpow.pop %v1312
        %v1314 = vmul.f32 %v1283, 1.442695
        %v1315 = vpow.pop %v1314
        %1317 = vset.pattern.permute.xlu0 0
        %1318 = vperm.xlu0 %1317, %v1252
        %v1319 = vpop.permute.xlu0 %1318
        %1322 = vset.pattern.permute.xlu0 0
        %1323 = vperm.xlu0 %1322, %v1253
        %v1324 = vpop.permute.xlu0 %1323
        %1327 = vset.pattern.permute.xlu0 0
        %1328 = vperm.xlu0 %1327, %v1254
        %v1329 = vpop.permute.xlu0 %1328
        %1332 = vset.pattern.permute.xlu0 0
        %1333 = vperm.xlu0 %1332, %v1255
        %v1334 = vpop.permute.xlu0 %1333
        %1337 = vset.pattern.permute.xlu0 0
        %1338 = vperm.xlu0 %1337, %v1256
        %v1339 = vpop.permute.xlu0 %1338
        %1342 = vset.pattern.permute.xlu0 0
        %1343 = vperm.xlu0 %1342, %v1257
        %v1344 = vpop.permute.xlu0 %1343
        %1347 = vset.pattern.permute.xlu0 0
        %1348 = vperm.xlu0 %1347, %v1258
        %v1349 = vpop.permute.xlu0 %1348
        %1352 = vset.pattern.permute.xlu0 0
        %1353 = vperm.xlu0 %1352, %v1259
        %v1354 = vpop.permute.xlu0 %1353
        %1357 = vset.pattern.permute.xlu0 0
        %1358 = vperm.xlu0 %1357, %v1260
        %v1359 = vpop.permute.xlu0 %1358
        %1362 = vset.pattern.permute.xlu0 0
        %1363 = vperm.xlu0 %1362, %v1261
        %v1364 = vpop.permute.xlu0 %1363
        %1367 = vset.pattern.permute.xlu0 0
        %1368 = vperm.xlu0 %1367, %v1262
        %v1369 = vpop.permute.xlu0 %1368
        %1372 = vset.pattern.permute.xlu0 0
        %1373 = vperm.xlu0 %1372, %v1263
        %v1374 = vpop.permute.xlu0 %1373
        %1377 = vset.pattern.permute.xlu0 0
        %1378 = vperm.xlu0 %1377, %v1264
        %v1379 = vpop.permute.xlu0 %1378
        %1382 = vset.pattern.permute.xlu0 0
        %1383 = vperm.xlu0 %1382, %v1265
        %v1384 = vpop.permute.xlu0 %1383
        %1387 = vset.pattern.permute.xlu0 0
        %1388 = vperm.xlu0 %1387, %v1266
        %v1389 = vpop.permute.xlu0 %1388
        %1392 = vset.pattern.permute.xlu0 0
        %1393 = vperm.xlu0 %1392, %v1267
        %v1394 = vpop.permute.xlu0 %1393
        %v1396 = vsub.f32 %v1165, %v1319
        %v1397 = vsub.f32 %v1167, %v1324
        %v1398 = vsub.f32 %v1170, %v1329
        %v1399 = vsub.f32 %v1172, %v1334
        %v1400 = vsub.f32 %v1175, %v1339
        %v1401 = vsub.f32 %v1177, %v1344
        %v1402 = vsub.f32 %v1180, %v1349
        %v1403 = vsub.f32 %v1182, %v1354
        %v1404 = vsub.f32 %v1185, %v1359
        %v1405 = vsub.f32 %v1187, %v1364
        %v1406 = vsub.f32 %v1190, %v1369
        %v1407 = vsub.f32 %v1192, %v1374
        %v1408 = vsub.f32 %v1195, %v1379
        %v1409 = vsub.f32 %v1197, %v1384
        %v1410 = vsub.f32 %v1200, %v1389
        %v1411 = vsub.f32 %v1202, %v1394
        %v1412 = vmul.f32 %v1396, 1.442695
        %v1413 = vpow.pop %v1412
        %v1414 = vmul.f32 %v1397, 1.442695
        %v1415 = vpow.pop %v1414
        %v1416 = vmul.f32 %v1398, 1.442695
        %v1417 = vpow.pop %v1416
        %v1418 = vmul.f32 %v1399, 1.442695
        %v1419 = vpow.pop %v1418
        %v1420 = vmul.f32 %v1400, 1.442695
        %v1421 = vpow.pop %v1420
        %v1422 = vmul.f32 %v1401, 1.442695
        %v1423 = vpow.pop %v1422
        %v1424 = vmul.f32 %v1402, 1.442695
        %v1425 = vpow.pop %v1424
        %v1426 = vmul.f32 %v1403, 1.442695
        %v1427 = vpow.pop %v1426
        %v1428 = vmul.f32 %v1404, 1.442695
        %v1429 = vpow.pop %v1428
        %v1430 = vmul.f32 %v1405, 1.442695
        %v1431 = vpow.pop %v1430
        %v1432 = vmul.f32 %v1406, 1.442695
        %v1433 = vpow.pop %v1432
        %v1434 = vmul.f32 %v1407, 1.442695
        %v1435 = vpow.pop %v1434
        %v1436 = vmul.f32 %v1408, 1.442695
        %v1437 = vpow.pop %v1436
        %v1438 = vmul.f32 %v1409, 1.442695
        %v1439 = vpow.pop %v1438
        %v1440 = vmul.f32 %v1410, 1.442695
        %v1441 = vpow.pop %v1440
        %v1442 = vmul.f32 %v1411, 1.442695
        %v1443 = vpow.pop %v1442
        %v1444 = vld [vmem:[#allocation4] sm:$0xff]
        %v1445 = vld [vmem:[#allocation4 + $0x8] sm:$0xff]
        %v1446 = vld [vmem:[#allocation4 + $0x10] sm:$0xff]
        %v1447 = vld [vmem:[#allocation4 + $0x18] sm:$0xff]
        %v1448 = vld [vmem:[#allocation4 + $0x20] sm:$0xff]
        %v1449 = vld [vmem:[#allocation4 + $0x28] sm:$0xff]
        %v1450 = vld [vmem:[#allocation4 + $0x30] sm:$0xff]
        %v1451 = vld [vmem:[#allocation4 + $0x38] sm:$0xff]
        %v1452 = vld [vmem:[#allocation4 + $0x40] sm:$0xff]
        %v1453 = vld [vmem:[#allocation4 + $0x48] sm:$0xff]
        %v1454 = vld [vmem:[#allocation4 + $0x50] sm:$0xff]
        %v1455 = vld [vmem:[#allocation4 + $0x58] sm:$0xff]
        %v1456 = vld [vmem:[#allocation4 + $0x60] sm:$0xff]
        %v1457 = vld [vmem:[#allocation4 + $0x68] sm:$0xff]
        %v1458 = vld [vmem:[#allocation4 + $0x70] sm:$0xff]
        %v1459 = vld [vmem:[#allocation4 + $0x78] sm:$0xff]
        %v1460 = vmul.f32 %v1285, %v1444
        %v1461 = vmul.f32 %v1287, %v1445
        %v1462 = vmul.f32 %v1289, %v1446
        %v1463 = vmul.f32 %v1291, %v1447
        %v1464 = vmul.f32 %v1293, %v1448
        %v1465 = vmul.f32 %v1295, %v1449
        %v1466 = vmul.f32 %v1297, %v1450
        %v1467 = vmul.f32 %v1299, %v1451
        %v1468 = vmul.f32 %v1301, %v1452
        %v1469 = vmul.f32 %v1303, %v1453
        %v1470 = vmul.f32 %v1305, %v1454
        %v1471 = vmul.f32 %v1307, %v1455
        %v1472 = vmul.f32 %v1309, %v1456
        %v1473 = vmul.f32 %v1311, %v1457
        %v1474 = vmul.f32 %v1313, %v1458
        %v1475 = vmul.f32 %v1315, %v1459
        %1476 = vadd.xlane.f32.xlu0 %v1413
        %v1477 = vpop.xlane.xlu0 %1476
        %1478 = vadd.xlane.f32.xlu0 %v1415
        %v1479 = vpop.xlane.xlu0 %1478
        %1480 = vadd.xlane.f32.xlu0 %v1417
        %v1481 = vpop.xlane.xlu0 %1480
        %1482 = vadd.xlane.f32.xlu0 %v1419
        %v1483 = vpop.xlane.xlu0 %1482
        %1484 = vadd.xlane.f32.xlu0 %v1421
        %v1485 = vpop.xlane.xlu0 %1484
        %1486 = vadd.xlane.f32.xlu0 %v1423
        %v1487 = vpop.xlane.xlu0 %1486
        %1488 = vadd.xlane.f32.xlu0 %v1425
        %v1489 = vpop.xlane.xlu0 %1488
        %1490 = vadd.xlane.f32.xlu0 %v1427
        %v1491 = vpop.xlane.xlu0 %1490
        %1492 = vadd.xlane.f32.xlu0 %v1429
        %v1493 = vpop.xlane.xlu0 %1492
        %1494 = vadd.xlane.f32.xlu0 %v1431
        %v1495 = vpop.xlane.xlu0 %1494
        %1496 = vadd.xlane.f32.xlu0 %v1433
        %v1497 = vpop.xlane.xlu0 %1496
        %1498 = vadd.xlane.f32.xlu0 %v1435
        %v1499 = vpop.xlane.xlu0 %1498
        %1500 = vadd.xlane.f32.xlu0 %v1437
        %v1501 = vpop.xlane.xlu0 %1500
        %1502 = vadd.xlane.f32.xlu0 %v1439
        %v1503 = vpop.xlane.xlu0 %1502
        %1504 = vadd.xlane.f32.xlu0 %v1441
        %v1505 = vpop.xlane.xlu0 %1504
        %1506 = vadd.xlane.f32.xlu0 %v1443
        %v1507 = vpop.xlane.xlu0 %1506
        %v1508 = vadd.f32 %v1460, %v1477
        %v1509 = vadd.f32 %v1461, %v1479
        %v1510 = vadd.f32 %v1462, %v1481
        %v1511 = vadd.f32 %v1463, %v1483
        %v1512 = vadd.f32 %v1464, %v1485
        %v1513 = vadd.f32 %v1465, %v1487
        %v1514 = vadd.f32 %v1466, %v1489
        %v1515 = vadd.f32 %v1467, %v1491
        %v1516 = vadd.f32 %v1468, %v1493
        %v1517 = vadd.f32 %v1469, %v1495
        %v1518 = vadd.f32 %v1470, %v1497
        %v1519 = vadd.f32 %v1471, %v1499
        %v1520 = vadd.f32 %v1472, %v1501
        %v1521 = vadd.f32 %v1473, %v1503
        %v1522 = vadd.f32 %v1474, %v1505
        %v1523 = vadd.f32 %v1475, %v1507
        %vm1524 = vcmask 7168
        %1525 = vst.msk [vmem:[#allocation4] sm:$0xff] %vm1524, %v1508
        %1526 = vst.msk [vmem:[#allocation4 + $0x8] sm:$0xff] %vm1524, %v1509
        %1527 = vst.msk [vmem:[#allocation4 + $0x10] sm:$0xff] %vm1524, %v1510
        %1528 = vst.msk [vmem:[#allocation4 + $0x18] sm:$0xff] %vm1524, %v1511
        %1529 = vst.msk [vmem:[#allocation4 + $0x20] sm:$0xff] %vm1524, %v1512
        %1530 = vst.msk [vmem:[#allocation4 + $0x28] sm:$0xff] %vm1524, %v1513
        %1531 = vst.msk [vmem:[#allocation4 + $0x30] sm:$0xff] %vm1524, %v1514
        %1532 = vst.msk [vmem:[#allocation4 + $0x38] sm:$0xff] %vm1524, %v1515
        %1533 = vst.msk [vmem:[#allocation4 + $0x40] sm:$0xff] %vm1524, %v1516
        %1534 = vst.msk [vmem:[#allocation4 + $0x48] sm:$0xff] %vm1524, %v1517
        %1535 = vst.msk [vmem:[#allocation4 + $0x50] sm:$0xff] %vm1524, %v1518
        %1536 = vst.msk [vmem:[#allocation4 + $0x58] sm:$0xff] %vm1524, %v1519
        %1537 = vst.msk [vmem:[#allocation4 + $0x60] sm:$0xff] %vm1524, %v1520
        %1538 = vst.msk [vmem:[#allocation4 + $0x68] sm:$0xff] %vm1524, %v1521
        %1539 = vst.msk [vmem:[#allocation4 + $0x70] sm:$0xff] %vm1524, %v1522
        %1540 = vst.msk [vmem:[#allocation4 + $0x78] sm:$0xff] %vm1524, %v1523
        %v1541 = vld [vmem:[#allocation5] sm:$0xff]
        %v1542 = vld [vmem:[#allocation5 + $0x8] sm:$0xff]
        %v1543 = vld [vmem:[#allocation5 + $0x10] sm:$0xff]
        %v1544 = vld [vmem:[#allocation5 + $0x18] sm:$0xff]
        %v1545 = vld [vmem:[#allocation5 + $0x20] sm:$0xff]
        %v1546 = vld [vmem:[#allocation5 + $0x28] sm:$0xff]
        %v1547 = vld [vmem:[#allocation5 + $0x30] sm:$0xff]
        %v1548 = vld [vmem:[#allocation5 + $0x38] sm:$0xff]
        %v1549 = vld [vmem:[#allocation5 + $0x40] sm:$0xff]
        %v1550 = vld [vmem:[#allocation5 + $0x48] sm:$0xff]
        %v1551 = vld [vmem:[#allocation5 + $0x50] sm:$0xff]
        %v1552 = vld [vmem:[#allocation5 + $0x58] sm:$0xff]
        %v1553 = vld [vmem:[#allocation5 + $0x60] sm:$0xff]
        %v1554 = vld [vmem:[#allocation5 + $0x68] sm:$0xff]
        %v1555 = vld [vmem:[#allocation5 + $0x70] sm:$0xff]
        %v1556 = vld [vmem:[#allocation5 + $0x78] sm:$0xff]
        %1558 = vset.pattern.permute.xlu0 0
        %1559 = vperm.xlu0 %1558, %v1285
        %v1560 = vpop.permute.xlu0 %1559
        %1563 = vset.pattern.permute.xlu0 0
        %1564 = vperm.xlu0 %1563, %v1287
        %v1565 = vpop.permute.xlu0 %1564
        %1568 = vset.pattern.permute.xlu0 0
        %1569 = vperm.xlu0 %1568, %v1289
        %v1570 = vpop.permute.xlu0 %1569
        %1573 = vset.pattern.permute.xlu0 0
        %1574 = vperm.xlu0 %1573, %v1291
        %v1575 = vpop.permute.xlu0 %1574
        %1578 = vset.pattern.permute.xlu0 0
        %1579 = vperm.xlu0 %1578, %v1293
        %v1580 = vpop.permute.xlu0 %1579
        %1583 = vset.pattern.permute.xlu0 0
        %1584 = vperm.xlu0 %1583, %v1295
        %v1585 = vpop.permute.xlu0 %1584
        %1588 = vset.pattern.permute.xlu0 0
        %1589 = vperm.xlu0 %1588, %v1297
        %v1590 = vpop.permute.xlu0 %1589
        %1593 = vset.pattern.permute.xlu0 0
        %1594 = vperm.xlu0 %1593, %v1299
        %v1595 = vpop.permute.xlu0 %1594
        %1598 = vset.pattern.permute.xlu0 0
        %1599 = vperm.xlu0 %1598, %v1301
        %v1600 = vpop.permute.xlu0 %1599
        %1603 = vset.pattern.permute.xlu0 0
        %1604 = vperm.xlu0 %1603, %v1303
        %v1605 = vpop.permute.xlu0 %1604
        %1608 = vset.pattern.permute.xlu0 0
        %1609 = vperm.xlu0 %1608, %v1305
        %v1610 = vpop.permute.xlu0 %1609
        %1613 = vset.pattern.permute.xlu0 0
        %1614 = vperm.xlu0 %1613, %v1307
        %v1615 = vpop.permute.xlu0 %1614
        %1618 = vset.pattern.permute.xlu0 0
        %1619 = vperm.xlu0 %1618, %v1309
        %v1620 = vpop.permute.xlu0 %1619
        %1623 = vset.pattern.permute.xlu0 0
        %1624 = vperm.xlu0 %1623, %v1311
        %v1625 = vpop.permute.xlu0 %1624
        %1628 = vset.pattern.permute.xlu0 0
        %1629 = vperm.xlu0 %1628, %v1313
        %v1630 = vpop.permute.xlu0 %1629
        %1633 = vset.pattern.permute.xlu0 0
        %1634 = vperm.xlu0 %1633, %v1315
        %v1635 = vpop.permute.xlu0 %1634
        %v1637 = vmul.f32 %v1560, %v1541
        %v1638 = vmul.f32 %v1565, %v1542
        %v1639 = vmul.f32 %v1570, %v1543
        %v1640 = vmul.f32 %v1575, %v1544
        %v1641 = vmul.f32 %v1580, %v1545
        %v1642 = vmul.f32 %v1585, %v1546
        %v1643 = vmul.f32 %v1590, %v1547
        %v1644 = vmul.f32 %v1595, %v1548
        %v1645 = vmul.f32 %v1600, %v1549
        %v1646 = vmul.f32 %v1605, %v1550
        %v1647 = vmul.f32 %v1610, %v1551
        %v1648 = vmul.f32 %v1615, %v1552
        %v1649 = vmul.f32 %v1620, %v1553
        %v1650 = vmul.f32 %v1625, %v1554
        %v1651 = vmul.f32 %v1630, %v1555
        %v1652 = vmul.f32 %v1635, %v1556
        %v1653 = vpack.c.bf16 %v1415, %v1413
        %v1654 = vpack.c.bf16 %v1419, %v1417
        %v1655 = vpack.c.bf16 %v1423, %v1421
        %v1656 = vpack.c.bf16 %v1427, %v1425
        %v1657 = vpack.c.bf16 %v1431, %v1429
        %v1658 = vpack.c.bf16 %v1435, %v1433
        %v1659 = vpack.c.bf16 %v1439, %v1437
        %v1660 = vpack.c.bf16 %v1443, %v1441
        %v1661 = vpack.c.bf16 %v1005, %v1003
        %v1662 = vpack.c.bf16 %v1010, %v1008
        %v1663 = vpack.c.bf16 %v1015, %v1013
        %v1664 = vpack.c.bf16 %v1020, %v1018
        %v1665 = vpack.c.bf16 %v1025, %v1023
        %v1666 = vpack.c.bf16 %v1030, %v1028
        %v1667 = vpack.c.bf16 %v1035, %v1033
        %v1668 = vpack.c.bf16 %v1040, %v1038
        %1669 = vmatpush.bf16.msra.mxu0 %v1668
        %1670 = vmatpush.bf16.msra.mxu0 %v1667
        %1671 = vmatpush.bf16.msra.mxu0 %v1666
        %1672 = vmatpush.bf16.msra.mxu0 %v1665
        %1673 = vmatpush.bf16.msra.mxu0 %v1664
        %1674 = vmatpush.bf16.msra.mxu0 %v1663
        %1675 = vmatpush.bf16.msra.mxu0 %v1662
        %1676 = vmatpush.bf16.msra.mxu0 %v1661
        %1677 = vmatmul.bf16.gmra.mxu0 %v1653
        %v1678 = vpop.f32.mrf.mxu0
        %v1679 = vadd.f32 0.0, %v1678
        %v1680 = vpop.f32.mrf.mxu0
        %v1681 = vadd.f32 0.0, %v1680
        %1682 = vmatmul.bf16.gmra.mxu0 %v1654
        %v1683 = vpop.f32.mrf.mxu0
        %v1684 = vadd.f32 0.0, %v1683
        %v1685 = vpop.f32.mrf.mxu0
        %v1686 = vadd.f32 0.0, %v1685
        %1687 = vmatmul.bf16.gmra.mxu0 %v1655
        %v1688 = vpop.f32.mrf.mxu0
        %v1689 = vadd.f32 0.0, %v1688
        %v1690 = vpop.f32.mrf.mxu0
        %v1691 = vadd.f32 0.0, %v1690
        %1692 = vmatmul.bf16.gmra.mxu0 %v1656
        %v1693 = vpop.f32.mrf.mxu0
        %v1694 = vadd.f32 0.0, %v1693
        %v1695 = vpop.f32.mrf.mxu0
        %v1696 = vadd.f32 0.0, %v1695
        %1697 = vmatmul.bf16.gmra.mxu0 %v1657
        %v1698 = vpop.f32.mrf.mxu0
        %v1699 = vadd.f32 0.0, %v1698
        %v1700 = vpop.f32.mrf.mxu0
        %v1701 = vadd.f32 0.0, %v1700
        %1702 = vmatmul.bf16.gmra.mxu0 %v1658
        %v1703 = vpop.f32.mrf.mxu0
        %v1704 = vadd.f32 0.0, %v1703
        %v1705 = vpop.f32.mrf.mxu0
        %v1706 = vadd.f32 0.0, %v1705
        %1707 = vmatmul.bf16.gmra.mxu0 %v1659
        %v1708 = vpop.f32.mrf.mxu0
        %v1709 = vadd.f32 0.0, %v1708
        %v1710 = vpop.f32.mrf.mxu0
        %v1711 = vadd.f32 0.0, %v1710
        %1712 = vmatmul.bf16.gmra.mxu0 %v1660
        %v1713 = vpop.f32.mrf.mxu0
        %v1714 = vadd.f32 0.0, %v1713
        %v1715 = vpop.f32.mrf.mxu0
        %v1716 = vadd.f32 0.0, %v1715
        %1717 = vdwg.mxu0
        %v1718 = vadd.f32 %v1637, %v1679
        %v1719 = vadd.f32 %v1638, %v1681
        %v1720 = vadd.f32 %v1639, %v1684
        %v1721 = vadd.f32 %v1640, %v1686
        %v1722 = vadd.f32 %v1641, %v1689
        %v1723 = vadd.f32 %v1642, %v1691
        %v1724 = vadd.f32 %v1643, %v1694
        %v1725 = vadd.f32 %v1644, %v1696
        %v1726 = vadd.f32 %v1645, %v1699
        %v1727 = vadd.f32 %v1646, %v1701
        %v1728 = vadd.f32 %v1647, %v1704
        %v1729 = vadd.f32 %v1648, %v1706
        %v1730 = vadd.f32 %v1649, %v1709
        %v1731 = vadd.f32 %v1650, %v1711
        %v1732 = vadd.f32 %v1651, %v1714
        %v1733 = vadd.f32 %v1652, %v1716
        %1734 = vst.msk [vmem:[#allocation5] sm:$0xff] %vm1106, %v1718
        %1735 = vst.msk [vmem:[#allocation5 + $0x8] sm:$0xff] %vm1106, %v1719
        %1736 = vst.msk [vmem:[#allocation5 + $0x10] sm:$0xff] %vm1106, %v1720
        %1737 = vst.msk [vmem:[#allocation5 + $0x18] sm:$0xff] %vm1106, %v1721
        %1738 = vst.msk [vmem:[#allocation5 + $0x20] sm:$0xff] %vm1106, %v1722
        %1739 = vst.msk [vmem:[#allocation5 + $0x28] sm:$0xff] %vm1106, %v1723
        %1740 = vst.msk [vmem:[#allocation5 + $0x30] sm:$0xff] %vm1106, %v1724
        %1741 = vst.msk [vmem:[#allocation5 + $0x38] sm:$0xff] %vm1106, %v1725
        %1742 = vst.msk [vmem:[#allocation5 + $0x40] sm:$0xff] %vm1106, %v1726
        %1743 = vst.msk [vmem:[#allocation5 + $0x48] sm:$0xff] %vm1106, %v1727
        %1744 = vst.msk [vmem:[#allocation5 + $0x50] sm:$0xff] %vm1106, %v1728
        %1745 = vst.msk [vmem:[#allocation5 + $0x58] sm:$0xff] %vm1106, %v1729
        %1746 = vst.msk [vmem:[#allocation5 + $0x60] sm:$0xff] %vm1106, %v1730
        %1747 = vst.msk [vmem:[#allocation5 + $0x68] sm:$0xff] %vm1106, %v1731
        %1748 = vst.msk [vmem:[#allocation5 + $0x70] sm:$0xff] %vm1106, %v1732
        %1749 = vst.msk [vmem:[#allocation5 + $0x78] sm:$0xff] %vm1106, %v1733
        %1750 = vst.msk [vmem:[#allocation3] sm:$0xff] %vm1524, %v1252
        %1751 = vst.msk [vmem:[#allocation3 + $0x8] sm:$0xff] %vm1524, %v1253
        %1752 = vst.msk [vmem:[#allocation3 + $0x10] sm:$0xff] %vm1524, %v1254
        %1753 = vst.msk [vmem:[#allocation3 + $0x18] sm:$0xff] %vm1524, %v1255
        %1754 = vst.msk [vmem:[#allocation3 + $0x20] sm:$0xff] %vm1524, %v1256
        %1755 = vst.msk [vmem:[#allocation3 + $0x28] sm:$0xff] %vm1524, %v1257
        %1756 = vst.msk [vmem:[#allocation3 + $0x30] sm:$0xff] %vm1524, %v1258
        %1757 = vst.msk [vmem:[#allocation3 + $0x38] sm:$0xff] %vm1524, %v1259
        %1758 = vst.msk [vmem:[#allocation3 + $0x40] sm:$0xff] %vm1524, %v1260
        %1759 = vst.msk [vmem:[#allocation3 + $0x48] sm:$0xff] %vm1524, %v1261
        %1760 = vst.msk [vmem:[#allocation3 + $0x50] sm:$0xff] %vm1524, %v1262
        %1761 = vst.msk [vmem:[#allocation3 + $0x58] sm:$0xff] %vm1524, %v1263
        %1762 = vst.msk [vmem:[#allocation3 + $0x60] sm:$0xff] %vm1524, %v1264
        %1763 = vst.msk [vmem:[#allocation3 + $0x68] sm:$0xff] %vm1524, %v1265
        %1764 = vst.msk [vmem:[#allocation3 + $0x70] sm:$0xff] %vm1524, %v1266
        %1765 = vst.msk [vmem:[#allocation3 + $0x78] sm:$0xff] %vm1524, %v1267
        %p1766 = scmp.eq.s32.totalorder %s28, 1
        // Predicated region
        $region53: #{tpu_custom_call.1} parent=47 // pred_check
          %p1767 = pneg %p1766
        $region54: #{tpu_custom_call.1} parent=47 // pred_check_branch
          %1769 = sbr.rel (%p1767) target = $region56
        $region55: #{tpu_custom_call.1} parent=47 // pred_region
          %v1770 = vld [vmem:[#allocation5] sm:$0xff]
          %v1771 = vld [vmem:[#allocation5 + $0x8] sm:$0xff]
          %v1772 = vld [vmem:[#allocation5 + $0x10] sm:$0xff]
          %v1773 = vld [vmem:[#allocation5 + $0x18] sm:$0xff]
          %v1774 = vld [vmem:[#allocation5 + $0x20] sm:$0xff]
          %v1775 = vld [vmem:[#allocation5 + $0x28] sm:$0xff]
          %v1776 = vld [vmem:[#allocation5 + $0x30] sm:$0xff]
          %v1777 = vld [vmem:[#allocation5 + $0x38] sm:$0xff]
          %v1778 = vld [vmem:[#allocation5 + $0x40] sm:$0xff]
          %v1779 = vld [vmem:[#allocation5 + $0x48] sm:$0xff]
          %v1780 = vld [vmem:[#allocation5 + $0x50] sm:$0xff]
          %v1781 = vld [vmem:[#allocation5 + $0x58] sm:$0xff]
          %v1782 = vld [vmem:[#allocation5 + $0x60] sm:$0xff]
          %v1783 = vld [vmem:[#allocation5 + $0x68] sm:$0xff]
          %v1784 = vld [vmem:[#allocation5 + $0x70] sm:$0xff]
          %v1785 = vld [vmem:[#allocation5 + $0x78] sm:$0xff]
          %v1786 = vld [vmem:[#allocation4] sm:$0xff]
          %v1787 = vld [vmem:[#allocation4 + $0x8] sm:$0xff]
          %v1788 = vld [vmem:[#allocation4 + $0x10] sm:$0xff]
          %v1789 = vld [vmem:[#allocation4 + $0x18] sm:$0xff]
          %v1790 = vld [vmem:[#allocation4 + $0x20] sm:$0xff]
          %v1791 = vld [vmem:[#allocation4 + $0x28] sm:$0xff]
          %v1792 = vld [vmem:[#allocation4 + $0x30] sm:$0xff]
          %v1793 = vld [vmem:[#allocation4 + $0x38] sm:$0xff]
          %v1794 = vld [vmem:[#allocation4 + $0x40] sm:$0xff]
          %v1795 = vld [vmem:[#allocation4 + $0x48] sm:$0xff]
          %v1796 = vld [vmem:[#allocation4 + $0x50] sm:$0xff]
          %v1797 = vld [vmem:[#allocation4 + $0x58] sm:$0xff]
          %v1798 = vld [vmem:[#allocation4 + $0x60] sm:$0xff]
          %v1799 = vld [vmem:[#allocation4 + $0x68] sm:$0xff]
          %v1800 = vld [vmem:[#allocation4 + $0x70] sm:$0xff]
          %v1801 = vld [vmem:[#allocation4 + $0x78] sm:$0xff]
          %1803 = vset.pattern.permute.xlu0 0
          %1804 = vperm.xlu0 %1803, %v1786
          %v1805 = vpop.permute.xlu0 %1804
          %1808 = vset.pattern.permute.xlu0 0
          %1809 = vperm.xlu0 %1808, %v1787
          %v1810 = vpop.permute.xlu0 %1809
          %1813 = vset.pattern.permute.xlu0 0
          %1814 = vperm.xlu0 %1813, %v1788
          %v1815 = vpop.permute.xlu0 %1814
          %1818 = vset.pattern.permute.xlu0 0
          %1819 = vperm.xlu0 %1818, %v1789
          %v1820 = vpop.permute.xlu0 %1819
          %1823 = vset.pattern.permute.xlu0 0
          %1824 = vperm.xlu0 %1823, %v1790
          %v1825 = vpop.permute.xlu0 %1824
          %1828 = vset.pattern.permute.xlu0 0
          %1829 = vperm.xlu0 %1828, %v1791
          %v1830 = vpop.permute.xlu0 %1829
          %1833 = vset.pattern.permute.xlu0 0
          %1834 = vperm.xlu0 %1833, %v1792
          %v1835 = vpop.permute.xlu0 %1834
          %1838 = vset.pattern.permute.xlu0 0
          %1839 = vperm.xlu0 %1838, %v1793
          %v1840 = vpop.permute.xlu0 %1839
          %1843 = vset.pattern.permute.xlu0 0
          %1844 = vperm.xlu0 %1843, %v1794
          %v1845 = vpop.permute.xlu0 %1844
          %1848 = vset.pattern.permute.xlu0 0
          %1849 = vperm.xlu0 %1848, %v1795
          %v1850 = vpop.permute.xlu0 %1849
          %1853 = vset.pattern.permute.xlu0 0
          %1854 = vperm.xlu0 %1853, %v1796
          %v1855 = vpop.permute.xlu0 %1854
          %1858 = vset.pattern.permute.xlu0 0
          %1859 = vperm.xlu0 %1858, %v1797
          %v1860 = vpop.permute.xlu0 %1859
          %1863 = vset.pattern.permute.xlu0 0
          %1864 = vperm.xlu0 %1863, %v1798
          %v1865 = vpop.permute.xlu0 %1864
          %1868 = vset.pattern.permute.xlu0 0
          %1869 = vperm.xlu0 %1868, %v1799
          %v1870 = vpop.permute.xlu0 %1869
          %1873 = vset.pattern.permute.xlu0 0
          %1874 = vperm.xlu0 %1873, %v1800
          %v1875 = vpop.permute.xlu0 %1874
          %1878 = vset.pattern.permute.xlu0 0
          %1879 = vperm.xlu0 %1878, %v1801
          %v1880 = vpop.permute.xlu0 %1879
          %v1882 = vrcp.pop %v1805
          %v1883 = vmul.f32 %v1805, %v1882
          %v1884 = vsub.f32 1.0, %v1883
          %v1885 = vmul.f32 %v1882, %v1884
          %v1886 = vadd.f32 %v1882, %v1885
          %vm1887 = vweird.f32 %v1805
          %vm1888 = vweird.f32 %v1882
          %vm1889 = vmor %vm1887, %vm1888
          %v1890 = vsel %vm1889, %v1882, %v1886
          %v1891 = vand.u32 2147483647, %v1805
          %vm1892 = vcmp.eq.f32.partialorder %v1891, 8.507059e+37
          %v1893 = vand.u32 %v1805, 2147483648
          %v1894 = vor.u32 1.1754944e-38, %v1893
          %v1895 = vsel %vm1892, %v1894, %v1890
          %v1896 = vmul.f32 %v1770, %v1895
          %v1897 = vrcp.pop %v1810
          %v1898 = vmul.f32 %v1810, %v1897
          %v1899 = vsub.f32 1.0, %v1898
          %v1900 = vmul.f32 %v1897, %v1899
          %v1901 = vadd.f32 %v1897, %v1900
          %vm1902 = vweird.f32 %v1810
          %vm1903 = vweird.f32 %v1897
          %vm1904 = vmor %vm1902, %vm1903
          %v1905 = vsel %vm1904, %v1897, %v1901
          %v1906 = vand.u32 2147483647, %v1810
          %vm1907 = vcmp.eq.f32.partialorder %v1906, 8.507059e+37
          %v1908 = vand.u32 %v1810, 2147483648
          %v1909 = vor.u32 1.1754944e-38, %v1908
          %v1910 = vsel %vm1907, %v1909, %v1905
          %v1911 = vmul.f32 %v1771, %v1910
          %v1912 = vrcp.pop %v1815
          %v1913 = vmul.f32 %v1815, %v1912
          %v1914 = vsub.f32 1.0, %v1913
          %v1915 = vmul.f32 %v1912, %v1914
          %v1916 = vadd.f32 %v1912, %v1915
          %vm1917 = vweird.f32 %v1815
          %vm1918 = vweird.f32 %v1912
          %vm1919 = vmor %vm1917, %vm1918
          %v1920 = vsel %vm1919, %v1912, %v1916
          %v1921 = vand.u32 2147483647, %v1815
          %vm1922 = vcmp.eq.f32.partialorder %v1921, 8.507059e+37
          %v1923 = vand.u32 %v1815, 2147483648
          %v1924 = vor.u32 1.1754944e-38, %v1923
          %v1925 = vsel %vm1922, %v1924, %v1920
          %v1926 = vmul.f32 %v1772, %v1925
          %v1927 = vrcp.pop %v1820
          %v1928 = vmul.f32 %v1820, %v1927
          %v1929 = vsub.f32 1.0, %v1928
          %v1930 = vmul.f32 %v1927, %v1929
          %v1931 = vadd.f32 %v1927, %v1930
          %vm1932 = vweird.f32 %v1820
          %vm1933 = vweird.f32 %v1927
          %vm1934 = vmor %vm1932, %vm1933
          %v1935 = vsel %vm1934, %v1927, %v1931
          %v1936 = vand.u32 2147483647, %v1820
          %vm1937 = vcmp.eq.f32.partialorder %v1936, 8.507059e+37
          %v1938 = vand.u32 %v1820, 2147483648
          %v1939 = vor.u32 1.1754944e-38, %v1938
          %v1940 = vsel %vm1937, %v1939, %v1935
          %v1941 = vmul.f32 %v1773, %v1940
          %v1942 = vrcp.pop %v1825
          %v1943 = vmul.f32 %v1825, %v1942
          %v1944 = vsub.f32 1.0, %v1943
          %v1945 = vmul.f32 %v1942, %v1944
          %v1946 = vadd.f32 %v1942, %v1945
          %vm1947 = vweird.f32 %v1825
          %vm1948 = vweird.f32 %v1942
          %vm1949 = vmor %vm1947, %vm1948
          %v1950 = vsel %vm1949, %v1942, %v1946
          %v1951 = vand.u32 2147483647, %v1825
          %vm1952 = vcmp.eq.f32.partialorder %v1951, 8.507059e+37
          %v1953 = vand.u32 %v1825, 2147483648
          %v1954 = vor.u32 1.1754944e-38, %v1953
          %v1955 = vsel %vm1952, %v1954, %v1950
          %v1956 = vmul.f32 %v1774, %v1955
          %v1957 = vrcp.pop %v1830
          %v1958 = vmul.f32 %v1830, %v1957
          %v1959 = vsub.f32 1.0, %v1958
          %v1960 = vmul.f32 %v1957, %v1959
          %v1961 = vadd.f32 %v1957, %v1960
          %vm1962 = vweird.f32 %v1830
          %vm1963 = vweird.f32 %v1957
          %vm1964 = vmor %vm1962, %vm1963
          %v1965 = vsel %vm1964, %v1957, %v1961
          %v1966 = vand.u32 2147483647, %v1830
          %vm1967 = vcmp.eq.f32.partialorder %v1966, 8.507059e+37
          %v1968 = vand.u32 %v1830, 2147483648
          %v1969 = vor.u32 1.1754944e-38, %v1968
          %v1970 = vsel %vm1967, %v1969, %v1965
          %v1971 = vmul.f32 %v1775, %v1970
          %v1972 = vrcp.pop %v1835
          %v1973 = vmul.f32 %v1835, %v1972
          %v1974 = vsub.f32 1.0, %v1973
          %v1975 = vmul.f32 %v1972, %v1974
          %v1976 = vadd.f32 %v1972, %v1975
          %vm1977 = vweird.f32 %v1835
          %vm1978 = vweird.f32 %v1972
          %vm1979 = vmor %vm1977, %vm1978
          %v1980 = vsel %vm1979, %v1972, %v1976
          %v1981 = vand.u32 2147483647, %v1835
          %vm1982 = vcmp.eq.f32.partialorder %v1981, 8.507059e+37
          %v1983 = vand.u32 %v1835, 2147483648
          %v1984 = vor.u32 1.1754944e-38, %v1983
          %v1985 = vsel %vm1982, %v1984, %v1980
          %v1986 = vmul.f32 %v1776, %v1985
          %v1987 = vrcp.pop %v1840
          %v1988 = vmul.f32 %v1840, %v1987
          %v1989 = vsub.f32 1.0, %v1988
          %v1990 = vmul.f32 %v1987, %v1989
          %v1991 = vadd.f32 %v1987, %v1990
          %vm1992 = vweird.f32 %v1840
          %vm1993 = vweird.f32 %v1987
          %vm1994 = vmor %vm1992, %vm1993
          %v1995 = vsel %vm1994, %v1987, %v1991
          %v1996 = vand.u32 2147483647, %v1840
          %vm1997 = vcmp.eq.f32.partialorder %v1996, 8.507059e+37
          %v1998 = vand.u32 %v1840, 2147483648
          %v1999 = vor.u32 1.1754944e-38, %v1998
          %v2000 = vsel %vm1997, %v1999, %v1995
          %v2001 = vmul.f32 %v1777, %v2000
          %v2002 = vrcp.pop %v1845
          %v2003 = vmul.f32 %v1845, %v2002
          %v2004 = vsub.f32 1.0, %v2003
          %v2005 = vmul.f32 %v2002, %v2004
          %v2006 = vadd.f32 %v2002, %v2005
          %vm2007 = vweird.f32 %v1845
          %vm2008 = vweird.f32 %v2002
          %vm2009 = vmor %vm2007, %vm2008
          %v2010 = vsel %vm2009, %v2002, %v2006
          %v2011 = vand.u32 2147483647, %v1845
          %vm2012 = vcmp.eq.f32.partialorder %v2011, 8.507059e+37
          %v2013 = vand.u32 %v1845, 2147483648
          %v2014 = vor.u32 1.1754944e-38, %v2013
          %v2015 = vsel %vm2012, %v2014, %v2010
          %v2016 = vmul.f32 %v1778, %v2015
          %v2017 = vrcp.pop %v1850
          %v2018 = vmul.f32 %v1850, %v2017
          %v2019 = vsub.f32 1.0, %v2018
          %v2020 = vmul.f32 %v2017, %v2019
          %v2021 = vadd.f32 %v2017, %v2020
          %vm2022 = vweird.f32 %v1850
          %vm2023 = vweird.f32 %v2017
          %vm2024 = vmor %vm2022, %vm2023
          %v2025 = vsel %vm2024, %v2017, %v2021
          %v2026 = vand.u32 2147483647, %v1850
          %vm2027 = vcmp.eq.f32.partialorder %v2026, 8.507059e+37
          %v2028 = vand.u32 %v1850, 2147483648
          %v2029 = vor.u32 1.1754944e-38, %v2028
          %v2030 = vsel %vm2027, %v2029, %v2025
          %v2031 = vmul.f32 %v1779, %v2030
          %v2032 = vrcp.pop %v1855
          %v2033 = vmul.f32 %v1855, %v2032
          %v2034 = vsub.f32 1.0, %v2033
          %v2035 = vmul.f32 %v2032, %v2034
          %v2036 = vadd.f32 %v2032, %v2035
          %vm2037 = vweird.f32 %v1855
          %vm2038 = vweird.f32 %v2032
          %vm2039 = vmor %vm2037, %vm2038
          %v2040 = vsel %vm2039, %v2032, %v2036
          %v2041 = vand.u32 2147483647, %v1855
          %vm2042 = vcmp.eq.f32.partialorder %v2041, 8.507059e+37
          %v2043 = vand.u32 %v1855, 2147483648
          %v2044 = vor.u32 1.1754944e-38, %v2043
          %v2045 = vsel %vm2042, %v2044, %v2040
          %v2046 = vmul.f32 %v1780, %v2045
          %v2047 = vrcp.pop %v1860
          %v2048 = vmul.f32 %v1860, %v2047
          %v2049 = vsub.f32 1.0, %v2048
          %v2050 = vmul.f32 %v2047, %v2049
          %v2051 = vadd.f32 %v2047, %v2050
          %vm2052 = vweird.f32 %v1860
          %vm2053 = vweird.f32 %v2047
          %vm2054 = vmor %vm2052, %vm2053
          %v2055 = vsel %vm2054, %v2047, %v2051
          %v2056 = vand.u32 2147483647, %v1860
          %vm2057 = vcmp.eq.f32.partialorder %v2056, 8.507059e+37
          %v2058 = vand.u32 %v1860, 2147483648
          %v2059 = vor.u32 1.1754944e-38, %v2058
          %v2060 = vsel %vm2057, %v2059, %v2055
          %v2061 = vmul.f32 %v1781, %v2060
          %v2062 = vrcp.pop %v1865
          %v2063 = vmul.f32 %v1865, %v2062
          %v2064 = vsub.f32 1.0, %v2063
          %v2065 = vmul.f32 %v2062, %v2064
          %v2066 = vadd.f32 %v2062, %v2065
          %vm2067 = vweird.f32 %v1865
          %vm2068 = vweird.f32 %v2062
          %vm2069 = vmor %vm2067, %vm2068
          %v2070 = vsel %vm2069, %v2062, %v2066
          %v2071 = vand.u32 2147483647, %v1865
          %vm2072 = vcmp.eq.f32.partialorder %v2071, 8.507059e+37
          %v2073 = vand.u32 %v1865, 2147483648
          %v2074 = vor.u32 1.1754944e-38, %v2073
          %v2075 = vsel %vm2072, %v2074, %v2070
          %v2076 = vmul.f32 %v1782, %v2075
          %v2077 = vrcp.pop %v1870
          %v2078 = vmul.f32 %v1870, %v2077
          %v2079 = vsub.f32 1.0, %v2078
          %v2080 = vmul.f32 %v2077, %v2079
          %v2081 = vadd.f32 %v2077, %v2080
          %vm2082 = vweird.f32 %v1870
          %vm2083 = vweird.f32 %v2077
          %vm2084 = vmor %vm2082, %vm2083
          %v2085 = vsel %vm2084, %v2077, %v2081
          %v2086 = vand.u32 2147483647, %v1870
          %vm2087 = vcmp.eq.f32.partialorder %v2086, 8.507059e+37
          %v2088 = vand.u32 %v1870, 2147483648
          %v2089 = vor.u32 1.1754944e-38, %v2088
          %v2090 = vsel %vm2087, %v2089, %v2085
          %v2091 = vmul.f32 %v1783, %v2090
          %v2092 = vrcp.pop %v1875
          %v2093 = vmul.f32 %v1875, %v2092
          %v2094 = vsub.f32 1.0, %v2093
          %v2095 = vmul.f32 %v2092, %v2094
          %v2096 = vadd.f32 %v2092, %v2095
          %vm2097 = vweird.f32 %v1875
          %vm2098 = vweird.f32 %v2092
          %vm2099 = vmor %vm2097, %vm2098
          %v2100 = vsel %vm2099, %v2092, %v2096
          %v2101 = vand.u32 2147483647, %v1875
          %vm2102 = vcmp.eq.f32.partialorder %v2101, 8.507059e+37
          %v2103 = vand.u32 %v1875, 2147483648
          %v2104 = vor.u32 1.1754944e-38, %v2103
          %v2105 = vsel %vm2102, %v2104, %v2100
          %v2106 = vmul.f32 %v1784, %v2105
          %v2107 = vrcp.pop %v1880
          %v2108 = vmul.f32 %v1880, %v2107
          %v2109 = vsub.f32 1.0, %v2108
          %v2110 = vmul.f32 %v2107, %v2109
          %v2111 = vadd.f32 %v2107, %v2110
          %vm2112 = vweird.f32 %v1880
          %vm2113 = vweird.f32 %v2107
          %vm2114 = vmor %vm2112, %vm2113
          %v2115 = vsel %vm2114, %v2107, %v2111
          %v2116 = vand.u32 2147483647, %v1880
          %vm2117 = vcmp.eq.f32.partialorder %v2116, 8.507059e+37
          %v2118 = vand.u32 %v1880, 2147483648
          %v2119 = vor.u32 1.1754944e-38, %v2118
          %v2120 = vsel %vm2117, %v2119, %v2115
          %v2121 = vmul.f32 %v1785, %v2120
          %v2122 = vpack.c.bf16 %v1911, %v1896
          %v2123 = vpack.c.bf16 %v1941, %v1926
          %v2124 = vpack.c.bf16 %v1971, %v1956
          %v2125 = vpack.c.bf16 %v2001, %v1986
          %v2126 = vpack.c.bf16 %v2031, %v2016
          %v2127 = vpack.c.bf16 %v2061, %v2046
          %v2128 = vpack.c.bf16 %v2091, %v2076
          %v2129 = vpack.c.bf16 %v2121, %v2106
          %v2130 = vld [vmem:[%s421] sm:$0xf]
          %v2131 = vld [vmem:[%s421 + $0x4] sm:$0xf]
          %v2132 = vld [vmem:[%s421 + $0x8] sm:$0xf]
          %v2133 = vld [vmem:[%s421 + $0xc] sm:$0xf]
          %v2138 = vunpack.c.l.b16 %v2130
          %v2139 = vunpack.c.l.b16 %v2131
          %v2140 = vunpack.c.l.b16 %v2132
          %v2141 = vunpack.c.l.b16 %v2133
          %v2142 = vpack.c.b16 %v2139, %v2138
          %v2143 = vpack.c.b16 %v2141, %v2140
          %v2147 = vsel %vm1106, %v2122, 0
          %v2150 = vsel %vm1106, %v2123, 0
          %v2153 = vsel %vm1106, %v2124, 0
          %v2156 = vsel %vm1106, %v2125, 0
          %v2159 = vsel %vm1106, %v2126, 0
          %v2162 = vsel %vm1106, %v2127, 0
          %v2165 = vsel %vm1106, %v2128, 0
          %v2168 = vsel %vm1106, %v2129, 0
          %2170 = vmatpush.bf16.msra.mxu0 0
          %2171 = vmatpush.bf16.msra.mxu0 0
          %2172 = vmatpush.bf16.msra.mxu0 0
          %2173 = vmatpush.bf16.msra.mxu0 0
          %2174 = vmatpush.bf16.msra.mxu0 0
          %2175 = vmatpush.bf16.msra.mxu0 0
          %2176 = vmatpush.bf16.msra.mxu0 %v2143
          %2177 = vmatpush.bf16.msra.mxu0 %v2142
          %2178 = vmatmul.bf16.gmra.mxu0 %v2147
          %v2179 = vpop.f32.mrf.mxu0
          %v2180 = vadd.f32 0.0, %v2179
          %v2181 = vpop.f32.mrf.mxu0
          %v2182 = vadd.f32 0.0, %v2181
          %2183 = vmatmul.bf16.gmra.mxu0 %v2150
          %v2184 = vpop.f32.mrf.mxu0
          %v2185 = vadd.f32 0.0, %v2184
          %v2186 = vpop.f32.mrf.mxu0
          %v2187 = vadd.f32 0.0, %v2186
          %2188 = vmatmul.bf16.gmra.mxu0 %v2153
          %v2189 = vpop.f32.mrf.mxu0
          %v2190 = vadd.f32 0.0, %v2189
          %v2191 = vpop.f32.mrf.mxu0
          %v2192 = vadd.f32 0.0, %v2191
          %2193 = vmatmul.bf16.gmra.mxu0 %v2156
          %v2194 = vpop.f32.mrf.mxu0
          %v2195 = vadd.f32 0.0, %v2194
          %v2196 = vpop.f32.mrf.mxu0
          %v2197 = vadd.f32 0.0, %v2196
          %2198 = vmatmul.bf16.gmra.mxu0 %v2159
          %v2199 = vpop.f32.mrf.mxu0
          %v2200 = vadd.f32 0.0, %v2199
          %v2201 = vpop.f32.mrf.mxu0
          %v2202 = vadd.f32 0.0, %v2201
          %2203 = vmatmul.bf16.gmra.mxu0 %v2162
          %v2204 = vpop.f32.mrf.mxu0
          %v2205 = vadd.f32 0.0, %v2204
          %v2206 = vpop.f32.mrf.mxu0
          %v2207 = vadd.f32 0.0, %v2206
          %2208 = vmatmul.bf16.gmra.mxu0 %v2165
          %v2209 = vpop.f32.mrf.mxu0
          %v2210 = vadd.f32 0.0, %v2209
          %v2211 = vpop.f32.mrf.mxu0
          %v2212 = vadd.f32 0.0, %v2211
          %2213 = vmatmul.bf16.gmra.mxu0 %v2168
          %v2214 = vpop.f32.mrf.mxu0
          %v2215 = vadd.f32 0.0, %v2214
          %v2216 = vpop.f32.mrf.mxu0
          %v2217 = vadd.f32 0.0, %v2216
          %2218 = vdwg.mxu0
          %p2219 = scmp.eq.s32.totalorder %s27, 0
          // Predicated region
          $region57: #{tpu_custom_call.1} parent=55 // pred_check
            %p2220 = pneg %p2219
          $region58: #{tpu_custom_call.1} parent=55 // pred_check_branch
            %2222 = sbr.rel (%p2220) target = $region60
          $region59: #{tpu_custom_call.1} parent=55 // pred_region
            %2223 = vst [vmem:[#allocation6] sm:$0xff] %v2180
            %2224 = vst [vmem:[#allocation6 + $0x8] sm:$0xff] %v2182
            %2225 = vst [vmem:[#allocation6 + $0x10] sm:$0xff] %v2185
            %2226 = vst [vmem:[#allocation6 + $0x18] sm:$0xff] %v2187
            %2227 = vst [vmem:[#allocation6 + $0x20] sm:$0xff] %v2190
            %2228 = vst [vmem:[#allocation6 + $0x28] sm:$0xff] %v2192
            %2229 = vst [vmem:[#allocation6 + $0x30] sm:$0xff] %v2195
            %2230 = vst [vmem:[#allocation6 + $0x38] sm:$0xff] %v2197
            %2231 = vst [vmem:[#allocation6 + $0x40] sm:$0xff] %v2200
            %2232 = vst [vmem:[#allocation6 + $0x48] sm:$0xff] %v2202
            %2233 = vst [vmem:[#allocation6 + $0x50] sm:$0xff] %v2205
            %2234 = vst [vmem:[#allocation6 + $0x58] sm:$0xff] %v2207
            %2235 = vst [vmem:[#allocation6 + $0x60] sm:$0xff] %v2210
            %2236 = vst [vmem:[#allocation6 + $0x68] sm:$0xff] %v2212
            %2237 = vst [vmem:[#allocation6 + $0x70] sm:$0xff] %v2215
            %2238 = vst [vmem:[#allocation6 + $0x78] sm:$0xff] %v2217
          $region60: #{tpu_custom_call.1} parent=55 // pred_fallthru
            _
          %p2239 = scmp.gt.s32.totalorder %s27, 0
          // Predicated region
          $region61: #{tpu_custom_call.1} parent=55 // pred_check
            %p2240 = pneg %p2239
          $region62: #{tpu_custom_call.1} parent=55 // pred_check_branch
            %2242 = sbr.rel (%p2240) target = $region64
          $region63: #{tpu_custom_call.1} parent=55 // pred_region
            %v2243 = vld [vmem:[#allocation6] sm:$0xff]
            %v2244 = vld [vmem:[#allocation6 + $0x8] sm:$0xff]
            %v2245 = vld [vmem:[#allocation6 + $0x10] sm:$0xff]
            %v2246 = vld [vmem:[#allocation6 + $0x18] sm:$0xff]
            %v2247 = vld [vmem:[#allocation6 + $0x20] sm:$0xff]
            %v2248 = vld [vmem:[#allocation6 + $0x28] sm:$0xff]
            %v2249 = vld [vmem:[#allocation6 + $0x30] sm:$0xff]
            %v2250 = vld [vmem:[#allocation6 + $0x38] sm:$0xff]
            %v2251 = vld [vmem:[#allocation6 + $0x40] sm:$0xff]
            %v2252 = vld [vmem:[#allocation6 + $0x48] sm:$0xff]
            %v2253 = vld [vmem:[#allocation6 + $0x50] sm:$0xff]
            %v2254 = vld [vmem:[#allocation6 + $0x58] sm:$0xff]
            %v2255 = vld [vmem:[#allocation6 + $0x60] sm:$0xff]
            %v2256 = vld [vmem:[#allocation6 + $0x68] sm:$0xff]
            %v2257 = vld [vmem:[#allocation6 + $0x70] sm:$0xff]
            %v2258 = vld [vmem:[#allocation6 + $0x78] sm:$0xff]
            %v2259 = vadd.f32 %v2243, %v2180
            %v2260 = vadd.f32 %v2244, %v2182
            %v2261 = vadd.f32 %v2245, %v2185
            %v2262 = vadd.f32 %v2246, %v2187
            %v2263 = vadd.f32 %v2247, %v2190
            %v2264 = vadd.f32 %v2248, %v2192
            %v2265 = vadd.f32 %v2249, %v2195
            %v2266 = vadd.f32 %v2250, %v2197
            %v2267 = vadd.f32 %v2251, %v2200
            %v2268 = vadd.f32 %v2252, %v2202
            %v2269 = vadd.f32 %v2253, %v2205
            %v2270 = vadd.f32 %v2254, %v2207
            %v2271 = vadd.f32 %v2255, %v2210
            %v2272 = vadd.f32 %v2256, %v2212
            %v2273 = vadd.f32 %v2257, %v2215
            %v2274 = vadd.f32 %v2258, %v2217
            %2275 = vst [vmem:[#allocation6] sm:$0xff] %v2259
            %2276 = vst [vmem:[#allocation6 + $0x8] sm:$0xff] %v2260
            %2277 = vst [vmem:[#allocation6 + $0x10] sm:$0xff] %v2261
            %2278 = vst [vmem:[#allocation6 + $0x18] sm:$0xff] %v2262
            %2279 = vst [vmem:[#allocation6 + $0x20] sm:$0xff] %v2263
            %2280 = vst [vmem:[#allocation6 + $0x28] sm:$0xff] %v2264
            %2281 = vst [vmem:[#allocation6 + $0x30] sm:$0xff] %v2265
            %2282 = vst [vmem:[#allocation6 + $0x38] sm:$0xff] %v2266
            %2283 = vst [vmem:[#allocation6 + $0x40] sm:$0xff] %v2267
            %2284 = vst [vmem:[#allocation6 + $0x48] sm:$0xff] %v2268
            %2285 = vst [vmem:[#allocation6 + $0x50] sm:$0xff] %v2269
            %2286 = vst [vmem:[#allocation6 + $0x58] sm:$0xff] %v2270
            %2287 = vst [vmem:[#allocation6 + $0x60] sm:$0xff] %v2271
            %2288 = vst [vmem:[#allocation6 + $0x68] sm:$0xff] %v2272
            %2289 = vst [vmem:[#allocation6 + $0x70] sm:$0xff] %v2273
            %2290 = vst [vmem:[#allocation6 + $0x78] sm:$0xff] %v2274
          $region64: #{tpu_custom_call.1} parent=55 // pred_fallthru
            _
          %p2291 = scmp.eq.s32.totalorder %s27, 3
          // Predicated region
          $region65: #{tpu_custom_call.1} parent=55 // pred_check
            %p2292 = pneg %p2291
          $region66: #{tpu_custom_call.1} parent=55 // pred_check_branch
            %2294 = sbr.rel (%p2292) target = $region68
          $region67: #{tpu_custom_call.1} parent=55 // pred_region
            %v2295 = vld [vmem:[#allocation6] sm:$0xff]
            %v2296 = vld [vmem:[#allocation6 + $0x8] sm:$0xff]
            %v2297 = vld [vmem:[#allocation6 + $0x10] sm:$0xff]
            %v2298 = vld [vmem:[#allocation6 + $0x18] sm:$0xff]
            %v2299 = vld [vmem:[#allocation6 + $0x20] sm:$0xff]
            %v2300 = vld [vmem:[#allocation6 + $0x28] sm:$0xff]
            %v2301 = vld [vmem:[#allocation6 + $0x30] sm:$0xff]
            %v2302 = vld [vmem:[#allocation6 + $0x38] sm:$0xff]
            %v2303 = vld [vmem:[#allocation6 + $0x40] sm:$0xff]
            %v2304 = vld [vmem:[#allocation6 + $0x48] sm:$0xff]
            %v2305 = vld [vmem:[#allocation6 + $0x50] sm:$0xff]
            %v2306 = vld [vmem:[#allocation6 + $0x58] sm:$0xff]
            %v2307 = vld [vmem:[#allocation6 + $0x60] sm:$0xff]
            %v2308 = vld [vmem:[#allocation6 + $0x68] sm:$0xff]
            %v2309 = vld [vmem:[#allocation6 + $0x70] sm:$0xff]
            %v2310 = vld [vmem:[#allocation6 + $0x78] sm:$0xff]
            %2311 = vst [vmem:[%s383] sm:$0xff] %v2295
            %2312 = vst [vmem:[%s383 + $0x8] sm:$0xff] %v2296
            %2313 = vst [vmem:[%s383 + $0x10] sm:$0xff] %v2297
            %2314 = vst [vmem:[%s383 + $0x18] sm:$0xff] %v2298
            %2315 = vst [vmem:[%s383 + $0x20] sm:$0xff] %v2299
            %2316 = vst [vmem:[%s383 + $0x28] sm:$0xff] %v2300
            %2317 = vst [vmem:[%s383 + $0x30] sm:$0xff] %v2301
            %2318 = vst [vmem:[%s383 + $0x38] sm:$0xff] %v2302
            %2319 = vst [vmem:[%s383 + $0x40] sm:$0xff] %v2303
            %2320 = vst [vmem:[%s383 + $0x48] sm:$0xff] %v2304
            %2321 = vst [vmem:[%s383 + $0x50] sm:$0xff] %v2305
            %2322 = vst [vmem:[%s383 + $0x58] sm:$0xff] %v2306
            %2323 = vst [vmem:[%s383 + $0x60] sm:$0xff] %v2307
            %2324 = vst [vmem:[%s383 + $0x68] sm:$0xff] %v2308
            %2325 = vst [vmem:[%s383 + $0x70] sm:$0xff] %v2309
            %2326 = vst [vmem:[%s383 + $0x78] sm:$0xff] %v2310
          $region68: #{tpu_custom_call.1} parent=55 // pred_fallthru
            _
        $region56: #{tpu_custom_call.1} parent=47 // pred_fallthru
          _
        %s2327 = sand.u32 %s230, 1
        %s2328 = scalar_lea.sflag [#allocation8], %s2327
        %s2329 = sand.u32 %s230, 1
        %s2330 = smul.addr %s2329, 128
        %s2331 = scalar_lea.vmem [#allocation7], %s2330
        // Predicated region
        $region69: #{tpu_custom_call.1} parent=47 // pred_check
          %p2332 = pneg %p240
        $region70: #{tpu_custom_call.1} parent=47 // pred_check_branch
          %2334 = sbr.rel (%p2332) target = $region72
        $region71: #{tpu_custom_call.1} parent=47 // pred_region
          %s2335 = smul.u32 16, %s26
          %2337 = vsyncadd %s2328, 0
          %s2338 = smul.addr %s2335, 8
          %s2339 = scalar_lea.hbm %s7, %s2338
          %s2340 = sshll.u32 %s2331, 4
          %s2341 = int_to_ptr.vmem [resolvable:$true] %s2340
          %s2342 = sshll.u32 %s2339, 4
          %s2343 = int_to_ptr.hbm [resolvable:$true] %s2342
          %2348 = dma.vmem_to_hbm [thread:$0]  %s2341, 2048, %s2343, %s2328, 128, 128, 8
        $region72: #{tpu_custom_call.1} parent=47 // pred_fallthru
          _
      $region48: #{tpu_custom_call.1} parent=5 // pred_fallthru
        _
      %p2349 = scmp.le.s32.totalorder 2, %s16
      // Predicated region
      $region73: #{tpu_custom_call.1} parent=5 // pred_check
        %p2350 = pneg %p2349
      $region74: #{tpu_custom_call.1} parent=5 // pred_check_branch
        %2352 = sbr.rel (%p2350) target = $region76
      $region75: #{tpu_custom_call.1} parent=5 // pred_region
        %s2353 = ssub.s32 %s16, 2
        // Predicated region
        $region77: #{tpu_custom_call.1} parent=75 // pred_check
          %p2354 = pneg %p246
        $region78: #{tpu_custom_call.1} parent=75 // pred_check_branch
          %2356 = sbr.rel (%p2354) target = $region80
        $region79: #{tpu_custom_call.1} parent=75 // pred_region
          %s2357 = sand.u32 %s231, 1
          %s2358 = scalar_lea.sflag [#allocation8], %s2357
          %s2359 = sand.u32 %s231, 1
          %s2360 = smul.addr %s2359, 128
          %s2361 = scalar_lea.vmem [#allocation7], %s2360
          %2363 = dma.done %s2358, 2048
        $region80: #{tpu_custom_call.1} parent=75 // pred_fallthru
          _
      $region76: #{tpu_custom_call.1} parent=5 // pred_fallthru
        _
    $region6: #{tpu_custom_call.1} parent=1 // loop_footer
      %s20 = sadd.s32 1, %s16
    $region7: #{tpu_custom_call.1} parent=1 // loop_footer_branch
      %15 = sbr.rel target = $region3
    $region8: #{tpu_custom_call.1} parent=1 // loop_exit
      _
    %2364 = vsyncpa [#allocation8], 1
    %s2365 = scalar_lea.sflag [#allocation8], 1
    %2366 = vsyncpa %s2365, 1

</llo_original>
